<compile_context>
chip_gen: v5e
topology: v5e:2x2
jax: 0.10.0
libtpu: 0.0.40
codegen_flags: <defaults>
</compile_context>

<pallas_src>
import functools

import jax
import jax.numpy as jnp
from jax.experimental import pallas as pl
from jax.experimental.pallas import tpu as pltpu

BN_EPS = 1e-5


def _vmem_limit_bytes():
    """~48 MiB on v7x (64 MiB VMEM), ~96 MiB on v5e/v6e (128 MiB VMEM)."""
    try:
        cap = int(pltpu.get_tpu_info().vmem_capacity_bytes)
    except Exception:  # conservative fallback
        cap = 64 * 1024 * 1024
    return min(cap * 3 // 4, 100 * 1024 * 1024)


# ----------------------------------------------------------------------------
# Kernel 1: direct 3x3x3 conv (stride 1, pad 1) + per-tile BN partial stats.
#   grid = (N, Do, kd); kd is the depth-tap reduction, input index_map selects
#   padded depth plane (do + kd) so input read amplification is only ~3x.
# ----------------------------------------------------------------------------
def _conv3d_stats_kernel(x_ref, w_ref, y_ref, st_ref, acc_ref):
    # x_ref : (1, 1, Hp, Wp, Cin)  bf16  padded input plane at depth do + kd
    # w_ref : (3, 9*Cin, Cout)     bf16  tap-concatenated weight, VMEM-resident
    # y_ref : (1, 1, Ho*Wo, Cout)  bf16  conv output tile (revisited across kd)
    # st_ref: (1, 1, 2, Cout)      f32   per-tile [sum; sum of squares]
    # acc_ref: (Ho*Wo, Cout)       f32   scratch accumulator
    kd = pl.program_id(2)
    _, _, Hp, Wp, cin = x_ref.shape
    Ho, Wo = Hp - 2, Wp - 2

    # Build the (Ho*Wo, 9*Cin) im2col slab in VMEM (bf16 slices straight off
    # the ref, no f32 upcast) and do ONE MXU matmul with K = 9*Cin.
    taps = []
    for t in range(9):                                 # unrolled (kh, kw) taps
        kh, kw = divmod(t, 3)
        taps.append(x_ref[0, 0, kh:kh + Ho, kw:kw + Wo, :])   # (Ho, Wo, Cin)
    slab = jnp.concatenate(taps, axis=-1).reshape(Ho * Wo, 9 * cin)
    prod = jnp.dot(slab, w_ref[kd], preferred_element_type=jnp.float32)

    @pl.when(kd == 0)
    def _init():                                       # no redundant acc load
        acc_ref[...] = prod

    @pl.when(kd > 0)
    def _accumulate():
        acc_ref[...] += prod

    @pl.when(kd == 2)
    def _finalize():
        acc = acc_ref[...]
        y_ref[0, 0] = acc.astype(y_ref.dtype)          # bf16 writeback
        st_ref[0, 0] = jnp.concatenate(                # single (2, C) store
            [jnp.sum(acc, axis=0, keepdims=True),
             jnp.sum(acc * acc, axis=0, keepdims=True)], axis=0)


def _conv3d_bn_stats(xp_bf16, w_bf16):
    """xp: padded (N, Dp, Hp, Wp, Cin) bf16; w: (3, 9*Cin, Cout) bf16.

    Returns y (N, Do, Ho*Wo, Cout) bf16 and stats (N, Do, 2, Cout) f32.
    """
    N, Dp, Hp, Wp, Cin = xp_bf16.shape
    Cout = w_bf16.shape[-1]
    Do, Ho, Wo = Dp - 2, Hp - 2, Wp - 2
    Mtot = N * Do * Ho * Wo

    flops = 2 * Mtot * 27 * Cin * Cout
    bytes_accessed = (3 * N * Dp * Hp * Wp * Cin * 2   # input planes (~3x)
                      + 27 * Cin * Cout * 2            # weights
                      + Mtot * Cout * 2                # conv output (bf16)
                      + N * Do * 2 * Cout * 4)         # partial stats

    return pl.pallas_call(
        _conv3d_stats_kernel,
        out_shape=(
            jax.ShapeDtypeStruct((N, Do, Ho * Wo, Cout), jnp.bfloat16),
            jax.ShapeDtypeStruct((N, Do, 2, Cout), jnp.float32),
        ),
        grid_spec=pltpu.PrefetchScalarGridSpec(
            num_scalar_prefetch=0,
            grid=(N, Do, 3),
            in_specs=[
                # depth-tap kd selects padded plane (do + kd): no HBM im2col
                pl.BlockSpec((1, 1, Hp, Wp, Cin),
                             lambda n, d, kd: (n, d + kd, 0, 0, 0)),
                # full tap-concatenated weight stays VMEM-resident.
                # TODO(synk): pipeline_mode=pl.Buffered(1) on v7x so the
                # constant-index weight is not double-buffered at large C.
                pl.BlockSpec((3, 9 * Cin, Cout),
                             lambda n, d, kd: (0, 0, 0)),
            ],
            out_specs=[
                pl.BlockSpec((1, 1, Ho * Wo, Cout),
                             lambda n, d, kd: (n, d, 0, 0)),
                pl.BlockSpec((1, 1, 2, Cout),
                             lambda n, d, kd: (n, d, 0, 0)),
            ],
            scratch_shapes=[pltpu.VMEM((Ho * Wo, Cout), jnp.float32)],
        ),
        compiler_params=pltpu.CompilerParams(
            dimension_semantics=("parallel", "parallel", "arbitrary"),
            vmem_limit_bytes=_vmem_limit_bytes(),
        ),
        cost_estimate=pl.CostEstimate(flops=flops, transcendentals=0,
                                      bytes_accessed=bytes_accessed),
    )(xp_bf16, w_bf16)


# ----------------------------------------------------------------------------
# Kernel 2: normalize (folded scale/shift) + optional residual + ReLU.
#   Operates on a lane-dense (M, H*W*C) view with multi-row tiles.
# ----------------------------------------------------------------------------
def _bn_relu_kernel(y_ref, sc_ref, sh_ref, o_ref):
    y = y_ref[...].astype(jnp.float32)
    o_ref[...] = jnp.maximum(y * sc_ref[...] + sh_ref[...], 0.0).astype(o_ref.dtype)


def _bn_add_relu_kernel(y_ref, sc_ref, sh_ref, r_ref, o_ref):
    y = y_ref[...].astype(jnp.float32)
    r = r_ref[...].astype(jnp.float32)
    o_ref[...] = jnp.maximum(y * sc_ref[...] + sh_ref[...] + r, 0.0).astype(o_ref.dtype)


def _pick_row_tile(m, k, elem_bytes=2, budget=4 << 20):
    """Largest multiple-of-8 divisor of m whose (tile, k) block fits the budget."""
    best, t = 0, 8
    while t <= m:
        if m % t == 0 and t * k * elem_bytes <= budget:
            best = t
        t += 8
    return best if best > 0 else m


def _apply_bn_relu(y, scale, shift, residual, out_dtype):
    """y: (M, K) bf16; scale/shift: (1, K) f32; residual: (M, K) bf16 | None."""
    M, K = y.shape
    tr = _pick_row_tile(M, K)
    y_spec = pl.BlockSpec((tr, K), lambda i: (i, 0))
    v_spec = pl.BlockSpec((1, K), lambda i: (0, 0))
    if residual is None:
        kernel = _bn_relu_kernel
        args = (y, scale, shift)
        specs = [y_spec, v_spec, v_spec]
    else:
        kernel = _bn_add_relu_kernel
        args = (y, scale, shift, residual)
        specs = [y_spec, v_spec, v_spec, y_spec]
    return pl.pallas_call(
        kernel,
        out_shape=jax.ShapeDtypeStruct((M, K), out_dtype),
        grid=(M // tr,),
        in_specs=specs,
        out_specs=y_spec,
        compiler_params=pltpu.CompilerParams(
            dimension_semantics=("parallel",),
            vmem_limit_bytes=_vmem_limit_bytes(),
        ),
    )(*args)


def _bn_scale_shift(stats, gamma, beta, count):
    """Fold batch statistics + affine params into per-channel (scale, shift)."""
    s = jnp.sum(stats, axis=(0, 1))                      # (2, C) f32
    mean = s[0] / count
    var = jnp.maximum(s[1] / count - mean * mean, 0.0)   # biased variance
    scale = gamma * jax.lax.rsqrt(var + BN_EPS)
    shift = beta - mean * scale
    return scale, shift                                  # (C,), (C,)


# ----------------------------------------------------------------------------
# BasicBlock forward
# ----------------------------------------------------------------------------
@functools.partial(jax.jit, static_argnames=("stride",))
def basic_block_forward(x, params, stride=1):
    """x: (N, D, H, W, Cin) f32.  Returns (N, D, H, W, planes) f32."""
    if stride != 1:
        # TODO(synk): strided conv1 + downsample (1x1x1 conv + BN) branch.
        raise NotImplementedError(
            "only the stride=1 / downsample=None configuration is implemented")

    N, D, H, W, Cin = x.shape
    planes = params["w1"].shape[-1]
    assert Cin == planes, "identity residual requires in_planes == planes"
    count = N * D * H * W          # BN element count per channel (stride == 1)

    xb = x.astype(jnp.bfloat16)    # single bf16 cast; reused as the residual

    def conv_bn(inp_bf16, w, g, b, residual_bf16, out_dtype):
        # TODO(synk): fold the halo padding into the conv kernel (masked taps /
        # aliased padded output) to drop this extra activation pass over HBM.
        xp = jnp.pad(inp_bf16, ((0, 0), (1, 1), (1, 1), (1, 1), (0, 0)))
        cin, cout = w.shape[3], w.shape[4]
        wb = w.reshape(3, 9 * cin, cout).astype(jnp.bfloat16)
        y, st = _conv3d_bn_stats(xp, wb)                 # pass 1: conv + stats
        scale, shift = _bn_scale_shift(st, g, b, count)
        k = H * W * cout                                 # lane-dense width
        y2 = y.reshape(N * D, k)
        sc = jnp.tile(scale, H * W).reshape(1, k)
        sh = jnp.tile(shift, H * W).reshape(1, k)
        res = None if residual_bf16 is None else residual_bf16.reshape(N * D, k)
        out = _apply_bn_relu(y2, sc, sh, res, out_dtype)  # pass 2: BN(+res)+ReLU
        return out.reshape(N, D, H, W, cout)

    # conv1 + bn1 + relu  (intermediate activation kept in bf16)
    out1 = conv_bn(xb, params["w1"], params["g1"], params["b1"], None,
                   jnp.bfloat16)
    # conv2 + bn2 + residual add + relu  (module-facing output in f32)
    out2 = conv_bn(out1, params["w2"], params["g2"], params["b2"], xb,
                   jnp.float32)
    return out2


# ----------------------------------------------------------------------------
# Pure-JAX reference (same semantics) for verification.
# ----------------------------------------------------------------------------
def _ref_forward(x, params, stride=1):
    def conv(inp, w, s):
        return jax.lax.conv_general_dilated(
            inp, w, window_strides=(s, s, s), padding=[(1, 1)] * 3,
            dimension_numbers=("NDHWC", "DHWIO", "NDHWC"))

    def bn(y, g, b):
        m = jnp.mean(y, axis=(0, 1, 2, 3), keepdims=True)
        v = jnp.mean((y - m) ** 2, axis=(0, 1, 2, 3), keepdims=True)
        return g.reshape(1, 1, 1, 1, -1) * (y - m) * jax.lax.rsqrt(v + BN_EPS) \
            + b.reshape(1, 1, 1, 1, -1)

    out = jax.nn.relu(bn(conv(x, params["w1"], stride),
                         params["g1"], params["b1"]))
    out = bn(conv(out, params["w2"], 1), params["g2"], params["b2"]) + x
    return jax.nn.relu(out)


# ----------------------------------------------------------------------------
if __name__ == "__main__":
    # Small shapes: batch=2, in_planes=planes=4, spatial D=H=W=8, stride=1,
    # downsample=None (identity residual).
    N, C, D, H, W = 2, 4, 8, 8, 8
    in_planes = planes = C
    stride = 1

    key = jax.random.PRNGKey(0)
    kx, k1, k2, k3, k4 = jax.random.split(key, 5)

    x = jax.random.normal(kx, (N, D, H, W, C), jnp.float32)

    fan1 = 27 * in_planes
    fan2 = 27 * planes
    params = {
        "w1": jax.random.normal(k1, (3, 3, 3, in_planes, planes), jnp.float32)
              * (2.0 / fan1) ** 0.5,
        "g1": 1.0 + 0.1 * jax.random.normal(k3, (planes,), jnp.float32),
        "b1": 0.1 * jax.random.normal(k4, (planes,), jnp.float32),
        "w2": jax.random.normal(k2, (3, 3, 3, planes, planes), jnp.float32)
              * (2.0 / fan2) ** 0.5,
        "g2": jnp.ones((planes,), jnp.float32),
        "b2": jnp.zeros((planes,), jnp.float32),
    }

    out = basic_block_forward(x, params, stride=stride)
    out = jax.block_until_ready(out)

    ref = jax.block_until_ready(_ref_forward(x, params, stride=stride))
    assert out.shape == ref.shape == (N, D, H, W, planes)
    # bf16 MXU inputs + bf16 intermediate activations vs the f32 reference.
    assert jnp.allclose(out, ref, rtol=5e-2, atol=7.5e-2), "mismatch vs reference"

    print("KERNEL_OK")
</pallas_src>

<mosaic_0001>
module attributes {stable_mosaic.version = 11 : i64} {
  func.func @_conv3d_stats_kernel(%arg0: i32, %arg1: i32, %arg2: i32, %arg3: memref<1x1x10x10x4xbf16, #tpu.memory_space<vmem>>, %arg4: memref<3x36x4xbf16, #tpu.memory_space<vmem>>, %arg5: memref<1x1x64x4xbf16, #tpu.memory_space<vmem>>, %arg6: memref<1x1x2x4xf32, #tpu.memory_space<vmem>>, %arg7: memref<64x4xf32, #tpu.memory_space<vmem>>) attributes {dimension_semantics = [#tpu.dimension_semantics<parallel>, #tpu.dimension_semantics<parallel>, #tpu.dimension_semantics<arbitrary>], iteration_bounds = array<i64: 2, 8, 3>, scalar_prefetch = 0 : i64, scratch_operands = 1 : i64, tpu.core_type = #tpu.core_type<tc>, window_params = [{transform_indices = @transform_0, window_bounds = array<i64: 1, 1, 10, 10, 4>}, {pipeline_mode = #tpu.pipeline_mode<synchronous>, transform_indices = @transform_1, window_bounds = array<i64: 3, 36, 4>}, {transform_indices = @transform_2, window_bounds = array<i64: 1, 1, 64, 4>}, {transform_indices = @transform_3, window_bounds = array<i64: 1, 1, 2, 4>}]} {
    %c0 = arith.constant 0 : index
    %c0_0 = arith.constant 0 : index
    %c0_1 = arith.constant 0 : index
    %c0_2 = arith.constant 0 : index
    %c0_3 = arith.constant 0 : index
    %0 = vector.load %arg3[%c0, %c0_0, %c0_1, %c0_2, %c0_3] : memref<1x1x10x10x4xbf16, #tpu.memory_space<vmem>>, vector<1x1x8x8x4xbf16>
    %1 = vector.shape_cast %0 : vector<1x1x8x8x4xbf16> to vector<8x8x4xbf16>
    %c0_4 = arith.constant 0 : index
    %c0_5 = arith.constant 0 : index
    %c0_6 = arith.constant 0 : index
    %c1 = arith.constant 1 : index
    %c0_7 = arith.constant 0 : index
    %2 = vector.load %arg3[%c0_4, %c0_5, %c0_6, %c1, %c0_7] : memref<1x1x10x10x4xbf16, #tpu.memory_space<vmem>>, vector<1x1x8x8x4xbf16>
    %3 = vector.shape_cast %2 : vector<1x1x8x8x4xbf16> to vector<8x8x4xbf16>
    %c0_8 = arith.constant 0 : index
    %c0_9 = arith.constant 0 : index
    %c0_10 = arith.constant 0 : index
    %c2 = arith.constant 2 : index
    %c0_11 = arith.constant 0 : index
    %4 = vector.load %arg3[%c0_8, %c0_9, %c0_10, %c2, %c0_11] : memref<1x1x10x10x4xbf16, #tpu.memory_space<vmem>>, vector<1x1x8x8x4xbf16>
    %5 = vector.shape_cast %4 : vector<1x1x8x8x4xbf16> to vector<8x8x4xbf16>
    %c0_12 = arith.constant 0 : index
    %c0_13 = arith.constant 0 : index
    %c1_14 = arith.constant 1 : index
    %c0_15 = arith.constant 0 : index
    %c0_16 = arith.constant 0 : index
    %6 = vector.load %arg3[%c0_12, %c0_13, %c1_14, %c0_15, %c0_16] : memref<1x1x10x10x4xbf16, #tpu.memory_space<vmem>>, vector<1x1x8x8x4xbf16>
    %7 = vector.shape_cast %6 : vector<1x1x8x8x4xbf16> to vector<8x8x4xbf16>
    %c0_17 = arith.constant 0 : index
    %c0_18 = arith.constant 0 : index
    %c1_19 = arith.constant 1 : index
    %c1_20 = arith.constant 1 : index
    %c0_21 = arith.constant 0 : index
    %8 = vector.load %arg3[%c0_17, %c0_18, %c1_19, %c1_20, %c0_21] : memref<1x1x10x10x4xbf16, #tpu.memory_space<vmem>>, vector<1x1x8x8x4xbf16>
    %9 = vector.shape_cast %8 : vector<1x1x8x8x4xbf16> to vector<8x8x4xbf16>
    %c0_22 = arith.constant 0 : index
    %c0_23 = arith.constant 0 : index
    %c1_24 = arith.constant 1 : index
    %c2_25 = arith.constant 2 : index
    %c0_26 = arith.constant 0 : index
    %10 = vector.load %arg3[%c0_22, %c0_23, %c1_24, %c2_25, %c0_26] : memref<1x1x10x10x4xbf16, #tpu.memory_space<vmem>>, vector<1x1x8x8x4xbf16>
    %11 = vector.shape_cast %10 : vector<1x1x8x8x4xbf16> to vector<8x8x4xbf16>
    %c0_27 = arith.constant 0 : index
    %c0_28 = arith.constant 0 : index
    %c2_29 = arith.constant 2 : index
    %c0_30 = arith.constant 0 : index
    %c0_31 = arith.constant 0 : index
    %12 = vector.load %arg3[%c0_27, %c0_28, %c2_29, %c0_30, %c0_31] : memref<1x1x10x10x4xbf16, #tpu.memory_space<vmem>>, vector<1x1x8x8x4xbf16>
    %13 = vector.shape_cast %12 : vector<1x1x8x8x4xbf16> to vector<8x8x4xbf16>
    %c0_32 = arith.constant 0 : index
    %c0_33 = arith.constant 0 : index
    %c2_34 = arith.constant 2 : index
    %c1_35 = arith.constant 1 : index
    %c0_36 = arith.constant 0 : index
    %14 = vector.load %arg3[%c0_32, %c0_33, %c2_34, %c1_35, %c0_36] : memref<1x1x10x10x4xbf16, #tpu.memory_space<vmem>>, vector<1x1x8x8x4xbf16>
    %15 = vector.shape_cast %14 : vector<1x1x8x8x4xbf16> to vector<8x8x4xbf16>
    %c0_37 = arith.constant 0 : index
    %c0_38 = arith.constant 0 : index
    %c2_39 = arith.constant 2 : index
    %c2_40 = arith.constant 2 : index
    %c0_41 = arith.constant 0 : index
    %16 = vector.load %arg3[%c0_37, %c0_38, %c2_39, %c2_40, %c0_41] : memref<1x1x10x10x4xbf16, #tpu.memory_space<vmem>>, vector<1x1x8x8x4xbf16>
    %17 = vector.shape_cast %16 : vector<1x1x8x8x4xbf16> to vector<8x8x4xbf16>
    %18 = tpu.concatenate %1, %3, %5, %7, %9, %11, %13, %15, %17 in 2 : vector<8x8x4xbf16>, vector<8x8x4xbf16>, vector<8x8x4xbf16>, vector<8x8x4xbf16>, vector<8x8x4xbf16>, vector<8x8x4xbf16>, vector<8x8x4xbf16>, vector<8x8x4xbf16>, vector<8x8x4xbf16> -> vector<8x8x36xbf16>
    %19 = vector.shape_cast %18 : vector<8x8x36xbf16> to vector<64x36xbf16>
    %20 = arith.index_cast %arg2 : i32 to index
    %c0_42 = arith.constant 0 : index
    %c0_43 = arith.constant 0 : index
    %21 = vector.load %arg4[%20, %c0_42, %c0_43] : memref<3x36x4xbf16, #tpu.memory_space<vmem>>, vector<1x36x4xbf16>
    %22 = vector.shape_cast %21 : vector<1x36x4xbf16> to vector<36x4xbf16>
    %cst = arith.constant dense<0.000000e+00> : vector<64x4xf32>
    %23 = tpu.matmul %19, %22, %cst {dimension_numbers = #tpu.dot_dimension_numbers<[1], [0], [0], [1], [0, 0, 1, 1], [], []>} : vector<64x36xbf16>, vector<36x4xbf16>, vector<64x4xf32> -> vector<64x4xf32>
    %c0_i32 = arith.constant 0 : i32
    %24 = arith.cmpi eq, %arg2, %c0_i32 : i32
    %25 = arith.extui %24 : i1 to i32
    %c0_i32_44 = arith.constant 0 : i32
    %26 = arith.cmpi ne, %25, %c0_i32_44 : i32
    scf.if %26 {
      %c0_48 = arith.constant 0 : index
      %c0_49 = arith.constant 0 : index
      %33 = vector.load %arg7[%c0_48, %c0_49] : memref<64x4xf32, #tpu.memory_space<vmem>>, vector<64x4xf32>
      tpu.vector_store %arg7[%c0_48, %c0_49], %23 {strides = array<i32>} : memref<64x4xf32, #tpu.memory_space<vmem>>, vector<64x4xf32>,
    } else {
    }
    %c0_i32_45 = arith.constant 0 : i32
    %27 = arith.cmpi sgt, %arg2, %c0_i32_45 : i32
    %28 = arith.extui %27 : i1 to i32
    %c0_i32_46 = arith.constant 0 : i32
    %29 = arith.cmpi ne, %28, %c0_i32_46 : i32
    scf.if %29 {
      %c0_48 = arith.constant 0 : index
      %c0_49 = arith.constant 0 : index
      %33 = vector.load %arg7[%c0_48, %c0_49] : memref<64x4xf32, #tpu.memory_space<vmem>>, vector<64x4xf32>
      %34 = arith.addf %33, %23 : vector<64x4xf32>
      %c0_50 = arith.constant 0 : index
      %c0_51 = arith.constant 0 : index
      %35 = vector.load %arg7[%c0_50, %c0_51] : memref<64x4xf32, #tpu.memory_space<vmem>>, vector<64x4xf32>
      tpu.vector_store %arg7[%c0_50, %c0_51], %34 {strides = array<i32>} : memref<64x4xf32, #tpu.memory_space<vmem>>, vector<64x4xf32>,
    } else {
    }
    %c2_i32 = arith.constant 2 : i32
    %30 = arith.cmpi eq, %arg2, %c2_i32 : i32
    %31 = arith.extui %30 : i1 to i32
    %c0_i32_47 = arith.constant 0 : i32
    %32 = arith.cmpi ne, %31, %c0_i32_47 : i32
    scf.if %32 {
      %c0_48 = arith.constant 0 : index
      %c0_49 = arith.constant 0 : index
      %33 = vector.load %arg7[%c0_48, %c0_49] : memref<64x4xf32, #tpu.memory_space<vmem>>, vector<64x4xf32>
      %34 = arith.truncf %33 : vector<64x4xf32> to vector<64x4xbf16>
      %c0_50 = arith.constant 0 : index
      %c0_51 = arith.constant 0 : index
      %c0_52 = arith.constant 0 : index
      %c0_53 = arith.constant 0 : index
      %35 = vector.load %arg5[%c0_50, %c0_51, %c0_52, %c0_53] : memref<1x1x64x4xbf16, #tpu.memory_space<vmem>>, vector<1x1x64x4xbf16>
      %36 = vector.shape_cast %35 : vector<1x1x64x4xbf16> to vector<64x4xbf16>
      %37 = vector.shape_cast %34 : vector<64x4xbf16> to vector<1x1x64x4xbf16>
      tpu.vector_store %arg5[%c0_50, %c0_51, %c0_52, %c0_53], %37 {strides = array<i32>} : memref<1x1x64x4xbf16, #tpu.memory_space<vmem>>, vector<1x1x64x4xbf16>,
      %cst_54 = arith.constant dense<0.000000e+00> : vector<4xf32>
      %38 = vector.multi_reduction <add>, %33, %cst_54 [0] : vector<64x4xf32> to vector<4xf32>
      %39 = vector.shape_cast %38 : vector<4xf32> to vector<1x4xf32>
      %40 = arith.mulf %33, %33 : vector<64x4xf32>
      %cst_55 = arith.constant dense<0.000000e+00> : vector<4xf32>
      %41 = vector.multi_reduction <add>, %40, %cst_55 [0] : vector<64x4xf32> to vector<4xf32>
      %42 = vector.shape_cast %41 : vector<4xf32> to vector<1x4xf32>
      %43 = tpu.concatenate %39, %42 in 0 : vector<1x4xf32>, vector<1x4xf32> -> vector<2x4xf32>
      %c0_56 = arith.constant 0 : index
      %c0_57 = arith.constant 0 : index
      %c0_58 = arith.constant 0 : index
      %c0_59 = arith.constant 0 : index
      %44 = vector.load %arg6[%c0_56, %c0_57, %c0_58, %c0_59] : memref<1x1x2x4xf32, #tpu.memory_space<vmem>>, vector<1x1x2x4xf32>
      %45 = vector.shape_cast %44 : vector<1x1x2x4xf32> to vector<2x4xf32>
      %46 = vector.shape_cast %43 : vector<2x4xf32> to vector<1x1x2x4xf32>
      tpu.vector_store %arg6[%c0_56, %c0_57, %c0_58, %c0_59], %46 {strides = array<i32>} : memref<1x1x2x4xf32, #tpu.memory_space<vmem>>, vector<1x1x2x4xf32>,
    } else {
    }
    return
  }
  func.func @transform_0(%arg0: i32, %arg1: i32, %arg2: i32) -> (i32, i32, i32, i32, i32) {
    %0 = arith.addi %arg1, %arg2 : i32
    %c0_i32 = arith.constant 0 : i32
    %c0_i32_0 = arith.constant 0 : i32
    %c0_i32_1 = arith.constant 0 : i32
    %c0_i32_2 = arith.constant 0 : i32
    return %arg0, %0, %c0_i32, %c0_i32_0, %c0_i32_1 : i32, i32, i32, i32, i32
  }
  func.func @transform_1(%arg0: i32, %arg1: i32, %arg2: i32) -> (i32, i32, i32) {
    %c0_i32 = arith.constant 0 : i32
    %c0_i32_0 = arith.constant 0 : i32
    %c0_i32_1 = arith.constant 0 : i32
    %c0_i32_2 = arith.constant 0 : i32
    return %c0_i32, %c0_i32_0, %c0_i32_1 : i32, i32, i32
  }
  func.func @transform_2(%arg0: i32, %arg1: i32, %arg2: i32) -> (i32, i32, i32, i32) {
    %c0_i32 = arith.constant 0 : i32
    %c0_i32_0 = arith.constant 0 : i32
    %c0_i32_1 = arith.constant 0 : i32
    return %arg0, %arg1, %c0_i32, %c0_i32_0 : i32, i32, i32, i32
  }
  func.func @transform_3(%arg0: i32, %arg1: i32, %arg2: i32) -> (i32, i32, i32, i32) {
    %c0_i32 = arith.constant 0 : i32
    %c0_i32_0 = arith.constant 0 : i32
    %c0_i32_1 = arith.constant 0 : i32
    return %arg0, %arg1, %c0_i32, %c0_i32_0 : i32, i32, i32, i32
  }
}

module attributes {stable_mosaic.version = 11 : i64} {
  func.func @_bn_relu_kernel(%arg0: i32, %arg1: memref<16x256xbf16, #tpu.memory_space<vmem>>, %arg2: memref<1x256xf32, #tpu.memory_space<vmem>>, %arg3: memref<1x256xf32, #tpu.memory_space<vmem>>, %arg4: memref<16x256xbf16, #tpu.memory_space<vmem>>) attributes {dimension_semantics = [#tpu.dimension_semantics<parallel>], iteration_bounds = array<i64: 1>, scalar_prefetch = 0 : i64, scratch_operands = 0 : i64, tpu.core_type = #tpu.core_type<tc>, window_params = [{transform_indices = @transform_0, window_bounds = array<i64: 16, 256>}, {pipeline_mode = #tpu.pipeline_mode<synchronous>, transform_indices = @transform_1, window_bounds = array<i64: 1, 256>}, {pipeline_mode = #tpu.pipeline_mode<synchronous>, transform_indices = @transform_2, window_bounds = array<i64: 1, 256>}, {transform_indices = @transform_3, window_bounds = array<i64: 16, 256>}]} {
    %c0 = arith.constant 0 : index
    %c0_0 = arith.constant 0 : index
    %0 = vector.load %arg1[%c0, %c0_0] : memref<16x256xbf16, #tpu.memory_space<vmem>>, vector<16x256xbf16>
    %1 = arith.extf %0 : vector<16x256xbf16> to vector<16x256xf32>
    %c0_1 = arith.constant 0 : index
    %c0_2 = arith.constant 0 : index
    %2 = vector.load %arg2[%c0_1, %c0_2] : memref<1x256xf32, #tpu.memory_space<vmem>>, vector<1x256xf32>
    %3 = vector.broadcast %2 : vector<1x256xf32> to vector<16x256xf32>
    %4 = arith.mulf %1, %3 : vector<16x256xf32>
    %c0_3 = arith.constant 0 : index
    %c0_4 = arith.constant 0 : index
    %5 = vector.load %arg3[%c0_3, %c0_4] : memref<1x256xf32, #tpu.memory_space<vmem>>, vector<1x256xf32>
    %6 = vector.broadcast %5 : vector<1x256xf32> to vector<16x256xf32>
    %7 = arith.addf %4, %6 : vector<16x256xf32>
    %cst = arith.constant 0.000000e+00 : f32
    %8 = vector.broadcast %cst : f32 to vector<16x256xf32>
    %9 = arith.maximumf %7, %8 : vector<16x256xf32>
    %10 = arith.truncf %9 : vector<16x256xf32> to vector<16x256xbf16>
    %c0_5 = arith.constant 0 : index
    %c0_6 = arith.constant 0 : index
    %11 = vector.load %arg4[%c0_5, %c0_6] : memref<16x256xbf16, #tpu.memory_space<vmem>>, vector<16x256xbf16>
    tpu.vector_store %arg4[%c0_5, %c0_6], %10 {strides = array<i32>} : memref<16x256xbf16, #tpu.memory_space<vmem>>, vector<16x256xbf16>,
    return
  }
  func.func @transform_0(%arg0: i32) -> (i32, i32) {
    %c0_i32 = arith.constant 0 : i32
    %c0_i32_0 = arith.constant 0 : i32
    return %arg0, %c0_i32 : i32, i32
  }
  func.func @transform_1(%arg0: i32) -> (i32, i32) {
    %c0_i32 = arith.constant 0 : i32
    %c0_i32_0 = arith.constant 0 : i32
    %c0_i32_1 = arith.constant 0 : i32
    return %c0_i32, %c0_i32_0 : i32, i32
  }
  func.func @transform_2(%arg0: i32) -> (i32, i32) {
    %c0_i32 = arith.constant 0 : i32
    %c0_i32_0 = arith.constant 0 : i32
    %c0_i32_1 = arith.constant 0 : i32
    return %c0_i32, %c0_i32_0 : i32, i32
  }
  func.func @transform_3(%arg0: i32) -> (i32, i32) {
    %c0_i32 = arith.constant 0 : i32
    %c0_i32_0 = arith.constant 0 : i32
    return %arg0, %c0_i32 : i32, i32
  }
}

module attributes {stable_mosaic.version = 11 : i64} {
  func.func @_bn_add_relu_kernel(%arg0: i32, %arg1: memref<16x256xbf16, #tpu.memory_space<vmem>>, %arg2: memref<1x256xf32, #tpu.memory_space<vmem>>, %arg3: memref<1x256xf32, #tpu.memory_space<vmem>>, %arg4: memref<16x256xbf16, #tpu.memory_space<vmem>>, %arg5: memref<16x256xf32, #tpu.memory_space<vmem>>) attributes {dimension_semantics = [#tpu.dimension_semantics<parallel>], iteration_bounds = array<i64: 1>, scalar_prefetch = 0 : i64, scratch_operands = 0 : i64, tpu.core_type = #tpu.core_type<tc>, window_params = [{transform_indices = @transform_0, window_bounds = array<i64: 16, 256>}, {pipeline_mode = #tpu.pipeline_mode<synchronous>, transform_indices = @transform_1, window_bounds = array<i64: 1, 256>}, {pipeline_mode = #tpu.pipeline_mode<synchronous>, transform_indices = @transform_2, window_bounds = array<i64: 1, 256>}, {transform_indices = @transform_3, window_bounds = array<i64: 16, 256>}, {transform_indices = @transform_4, window_bounds = array<i64: 16, 256>}]} {
    %c0 = arith.constant 0 : index
    %c0_0 = arith.constant 0 : index
    %0 = vector.load %arg1[%c0, %c0_0] : memref<16x256xbf16, #tpu.memory_space<vmem>>, vector<16x256xbf16>
    %1 = arith.extf %0 : vector<16x256xbf16> to vector<16x256xf32>
    %c0_1 = arith.constant 0 : index
    %c0_2 = arith.constant 0 : index
    %2 = vector.load %arg4[%c0_1, %c0_2] : memref<16x256xbf16, #tpu.memory_space<vmem>>, vector<16x256xbf16>
    %3 = arith.extf %2 : vector<16x256xbf16> to vector<16x256xf32>
    %c0_3 = arith.constant 0 : index
    %c0_4 = arith.constant 0 : index
    %4 = vector.load %arg2[%c0_3, %c0_4] : memref<1x256xf32, #tpu.memory_space<vmem>>, vector<1x256xf32>
    %5 = vector.broadcast %4 : vector<1x256xf32> to vector<16x256xf32>
    %6 = arith.mulf %1, %5 : vector<16x256xf32>
    %c0_5 = arith.constant 0 : index
    %c0_6 = arith.constant 0 : index
    %7 = vector.load %arg3[%c0_5, %c0_6] : memref<1x256xf32, #tpu.memory_space<vmem>>, vector<1x256xf32>
    %8 = vector.broadcast %7 : vector<1x256xf32> to vector<16x256xf32>
    %9 = arith.addf %6, %8 : vector<16x256xf32>
    %10 = arith.addf %9, %3 : vector<16x256xf32>
    %cst = arith.constant 0.000000e+00 : f32
    %11 = vector.broadcast %cst : f32 to vector<16x256xf32>
    %12 = arith.maximumf %10, %11 : vector<16x256xf32>
    %c0_7 = arith.constant 0 : index
    %c0_8 = arith.constant 0 : index
    %13 = vector.load %arg5[%c0_7, %c0_8] : memref<16x256xf32, #tpu.memory_space<vmem>>, vector<16x256xf32>
    tpu.vector_store %arg5[%c0_7, %c0_8], %12 {strides = array<i32>} : memref<16x256xf32, #tpu.memory_space<vmem>>, vector<16x256xf32>,
    return
  }
  func.func @transform_0(%arg0: i32) -> (i32, i32) {
    %c0_i32 = arith.constant 0 : i32
    %c0_i32_0 = arith.constant 0 : i32
    return %arg0, %c0_i32 : i32, i32
  }
  func.func @transform_1(%arg0: i32) -> (i32, i32) {
    %c0_i32 = arith.constant 0 : i32
    %c0_i32_0 = arith.constant 0 : i32
    %c0_i32_1 = arith.constant 0 : i32
    return %c0_i32, %c0_i32_0 : i32, i32
  }
  func.func @transform_2(%arg0: i32) -> (i32, i32) {
    %c0_i32 = arith.constant 0 : i32
    %c0_i32_0 = arith.constant 0 : i32
    %c0_i32_1 = arith.constant 0 : i32
    return %c0_i32, %c0_i32_0 : i32, i32
  }
  func.func @transform_3(%arg0: i32) -> (i32, i32) {
    %c0_i32 = arith.constant 0 : i32
    %c0_i32_0 = arith.constant 0 : i32
    return %arg0, %c0_i32 : i32, i32
  }
  func.func @transform_4(%arg0: i32) -> (i32, i32) {
    %c0_i32 = arith.constant 0 : i32
    %c0_i32_0 = arith.constant 0 : i32
    return %arg0, %c0_i32 : i32, i32
  }
}

</mosaic_0001>

<llo_original>
// kernel: tile.28
$region0: #{tile.28}
  #allocation0 [shape = 's32[1]{0}', space=sflag, size = 0x4, scoped, tag = 'scoped memory for tile.28']
  %s0 = inlined_call_operand.vmem [shape: f32[4], index: 0, kind: input, shape index: {}]
  %s1 = inlined_call_operand.vmem [shape: f32[64,4], index: 1, kind: output, shape index: {}]
  // Predicated region
  $region2: #{tile.28} parent=0 // pred_check
    _
  $region3: #{tile.28} parent=0 // pred_check_branch
    %3 = sbr.rel (0) target = $region5
  $region4: #{tile.28} parent=0 // pred_region
    _
  $region5: #{tile.28} parent=0 // pred_fallthru
    _
  %v4 = vld [vmem:[%s0] ss:$0 sm:$0xff]
  %5 = vst [vmem:[%s1] sm:$0xff] %v4
  %s6 = scalar_lea.vmem %s1, 8
  %7 = vst [vmem:[%s6] sm:$0xff] %v4
  %s8 = scalar_lea.vmem %s1, 16
  %9 = vst [vmem:[%s8] sm:$0xff] %v4
  %s10 = scalar_lea.vmem %s1, 24
  %11 = vst [vmem:[%s10] sm:$0xff] %v4
  %s12 = scalar_lea.vmem %s1, 32
  %13 = vst [vmem:[%s12] sm:$0xff] %v4
  %s14 = scalar_lea.vmem %s1, 40
  %15 = vst [vmem:[%s14] sm:$0xff] %v4
  %s16 = scalar_lea.vmem %s1, 48
  %17 = vst [vmem:[%s16] sm:$0xff] %v4
  %s18 = scalar_lea.vmem %s1, 56
  %19 = vst [vmem:[%s18] sm:$0xff] %v4

// kernel: tile.29
$region0: #{tile.29}
  %s0 = inlined_call_operand.vmem [shape: f32[64,4], index: 0, kind: input, shape index: {}]
  %s1 = inlined_call_operand.vmem [shape: f32[1,256], index: 1, kind: output, shape index: {}]
  $region1: #{tile.29} parent=0
    #allocation0 [shape = 'u8[8192]{0}', space=vmem, size = 0x2000, scoped, tag = 'scoped mem for output reshape']
    %v2 = vld [vmem:[%s0] sm:$0x1]
    %s3 = scalar_lea.vmem %s0, 31
    %v4 = vld [vmem:[%s3] sm:$0x2]
    %vm5 = vcmask 1041409
    %v6 = vsel %vm5, %v4, %v2
    %vm7 = vcmask 31744
    %8 = vst.msk [vmem:[#allocation0] ss:$8 sm:$0x3] %vm7, %v6
    %s9 = scalar_lea.vmem %s0, 31
    %v10 = vld [vmem:[%s9] sm:$0x1]
    %s11 = scalar_lea.vmem %s0, 62
    %v12 = vld [vmem:[%s11] sm:$0x2]
    %vm13 = vcmask 1041409
    %v14 = vsel %vm13, %v12, %v10
    %15 = vrot.lane.b32.xlu0 %v14, 124
    %v16 = vpop.permute.xlu0 %15
    %vm17 = vcmask 1048544
    %18 = vst.msk [vmem:[#allocation0] ss:$8 sm:$0x3] %vm17, %v16
    %s19 = scalar_lea.vmem %s0, 30
    %v20 = vld [vmem:[%s19] sm:$0x1]
    %s21 = scalar_lea.vmem %s0, 61
    %v22 = vld [vmem:[%s21] sm:$0x2]
    %vm23 = vcmask 1041409
    %v24 = vsel %vm23, %v22, %v20
    %25 = vrot.lane.b32.xlu0 %v24, 120
    %v26 = vpop.permute.xlu0 %25
    %vm27 = vcmask 1015744
    %28 = vst.msk [vmem:[#allocation0] ss:$8 sm:$0x3] %vm27, %v26
    %s29 = scalar_lea.vmem %s0, 29
    %v30 = vld [vmem:[%s29] sm:$0x1]
    %s31 = scalar_lea.vmem %s0, 60
    %v32 = vld [vmem:[%s31] sm:$0x2]
    %vm33 = vcmask 1041409
    %v34 = vsel %vm33, %v32, %v30
    %35 = vrot.lane.b32.xlu0 %v34, 116
    %v36 = vpop.permute.xlu0 %35
    %vm37 = vcmask 982944
    %38 = vst.msk [vmem:[#allocation0] ss:$8 sm:$0x3] %vm37, %v36
    %s39 = scalar_lea.vmem %s0, 28
    %v40 = vld [vmem:[%s39] sm:$0x1]
    %s41 = scalar_lea.vmem %s0, 59
    %v42 = vld [vmem:[%s41] sm:$0x2]
    %vm43 = vcmask 1041409
    %v44 = vsel %vm43, %v42, %v40
    %45 = vrot.lane.b32.xlu0 %v44, 112
    %v46 = vpop.permute.xlu0 %45
    %vm47 = vcmask 950144
    %48 = vst.msk [vmem:[#allocation0] ss:$8 sm:$0x3] %vm47, %v46
    %s49 = scalar_lea.vmem %s0, 27
    %v50 = vld [vmem:[%s49] sm:$0x1]
    %s51 = scalar_lea.vmem %s0, 58
    %v52 = vld [vmem:[%s51] sm:$0x2]
    %vm53 = vcmask 1041409
    %v54 = vsel %vm53, %v52, %v50
    %55 = vrot.lane.b32.xlu0 %v54, 108
    %v56 = vpop.permute.xlu0 %55
    %vm57 = vcmask 917344
    %58 = vst.msk [vmem:[#allocation0] ss:$8 sm:$0x3] %vm57, %v56
    %s59 = scalar_lea.vmem %s0, 26
    %v60 = vld [vmem:[%s59] sm:$0x1]
    %s61 = scalar_lea.vmem %s0, 57
    %v62 = vld [vmem:[%s61] sm:$0x2]
    %vm63 = vcmask 1041409
    %v64 = vsel %vm63, %v62, %v60
    %65 = vrot.lane.b32.xlu0 %v64, 104
    %v66 = vpop.permute.xlu0 %65
    %vm67 = vcmask 884544
    %68 = vst.msk [vmem:[#allocation0] ss:$8 sm:$0x3] %vm67, %v66
    %s69 = scalar_lea.vmem %s0, 25
    %v70 = vld [vmem:[%s69] sm:$0x1]
    %s71 = scalar_lea.vmem %s0, 56
    %v72 = vld [vmem:[%s71] sm:$0x2]
    %vm73 = vcmask 1041409
    %v74 = vsel %vm73, %v72, %v70
    %75 = vrot.lane.b32.xlu0 %v74, 100
    %v76 = vpop.permute.xlu0 %75
    %vm77 = vcmask 851744
    %78 = vst.msk [vmem:[#allocation0] ss:$8 sm:$0x3] %vm77, %v76
    %s79 = scalar_lea.vmem %s0, 24
    %v80 = vld [vmem:[%s79] sm:$0x1]
    %s81 = scalar_lea.vmem %s0, 55
    %v82 = vld [vmem:[%s81] sm:$0x2]
    %vm83 = vcmask 1041409
    %v84 = vsel %vm83, %v82, %v80
    %85 = vrot.lane.b32.xlu0 %v84, 96
    %v86 = vpop.permute.xlu0 %85
    %vm87 = vcmask 818944
    %88 = vst.msk [vmem:[#allocation0] ss:$8 sm:$0x3] %vm87, %v86
    %s89 = scalar_lea.vmem %s0, 23
    %v90 = vld [vmem:[%s89] sm:$0x1]
    %s91 = scalar_lea.vmem %s0, 54
    %v92 = vld [vmem:[%s91] sm:$0x2]
    %vm93 = vcmask 1041409
    %v94 = vsel %vm93, %v92, %v90
    %95 = vrot.lane.b32.xlu0 %v94, 92
    %v96 = vpop.permute.xlu0 %95
    %vm97 = vcmask 786144
    %98 = vst.msk [vmem:[#allocation0] ss:$8 sm:$0x3] %vm97, %v96
    %s99 = scalar_lea.vmem %s0, 22
    %v100 = vld [vmem:[%s99] sm:$0x1]
    %s101 = scalar_lea.vmem %s0, 53
    %v102 = vld [vmem:[%s101] sm:$0x2]
    %vm103 = vcmask 1041409
    %v104 = vsel %vm103, %v102, %v100
    %105 = vrot.lane.b32.xlu0 %v104, 88
    %v106 = vpop.permute.xlu0 %105
    %vm107 = vcmask 753344
    %108 = vst.msk [vmem:[#allocation0] ss:$8 sm:$0x3] %vm107, %v106
    %s109 = scalar_lea.vmem %s0, 21
    %v110 = vld [vmem:[%s109] sm:$0x1]
    %s111 = scalar_lea.vmem %s0, 52
    %v112 = vld [vmem:[%s111] sm:$0x2]
    %vm113 = vcmask 1041409
    %v114 = vsel %vm113, %v112, %v110
    %115 = vrot.lane.b32.xlu0 %v114, 84
    %v116 = vpop.permute.xlu0 %115
    %vm117 = vcmask 720544
    %118 = vst.msk [vmem:[#allocation0] ss:$8 sm:$0x3] %vm117, %v116
    %s119 = scalar_lea.vmem %s0, 20
    %v120 = vld [vmem:[%s119] sm:$0x1]
    %s121 = scalar_lea.vmem %s0, 51
    %v122 = vld [vmem:[%s121] sm:$0x2]
    %vm123 = vcmask 1041409
    %v124 = vsel %vm123, %v122, %v120
    %125 = vrot.lane.b32.xlu0 %v124, 80
    %v126 = vpop.permute.xlu0 %125
    %vm127 = vcmask 687744
    %128 = vst.msk [vmem:[#allocation0] ss:$8 sm:$0x3] %vm127, %v126
    %s129 = scalar_lea.vmem %s0, 19
    %v130 = vld [vmem:[%s129] sm:$0x1]
    %s131 = scalar_lea.vmem %s0, 50
    %v132 = vld [vmem:[%s131] sm:$0x2]
    %vm133 = vcmask 1041409
    %v134 = vsel %vm133, %v132, %v130
    %135 = vrot.lane.b32.xlu0 %v134, 76
    %v136 = vpop.permute.xlu0 %135
    %vm137 = vcmask 654944
    %138 = vst.msk [vmem:[#allocation0] ss:$8 sm:$0x3] %vm137, %v136
    %s139 = scalar_lea.vmem %s0, 18
    %v140 = vld [vmem:[%s139] sm:$0x1]
    %s141 = scalar_lea.vmem %s0, 49
    %v142 = vld [vmem:[%s141] sm:$0x2]
    %vm143 = vcmask 1041409
    %v144 = vsel %vm143, %v142, %v140
    %145 = vrot.lane.b32.xlu0 %v144, 72
    %v146 = vpop.permute.xlu0 %145
    %vm147 = vcmask 622144
    %148 = vst.msk [vmem:[#allocation0] ss:$8 sm:$0x3] %vm147, %v146
    %s149 = scalar_lea.vmem %s0, 17
    %v150 = vld [vmem:[%s149] sm:$0x1]
    %s151 = scalar_lea.vmem %s0, 48
    %v152 = vld [vmem:[%s151] sm:$0x2]
    %vm153 = vcmask 1041409
    %v154 = vsel %vm153, %v152, %v150
    %155 = vrot.lane.b32.xlu0 %v154, 68
    %v156 = vpop.permute.xlu0 %155
    %vm157 = vcmask 589344
    %158 = vst.msk [vmem:[#allocation0] ss:$8 sm:$0x3] %vm157, %v156
    %s159 = scalar_lea.vmem %s0, 16
    %v160 = vld [vmem:[%s159] sm:$0x1]
    %s161 = scalar_lea.vmem %s0, 47
    %v162 = vld [vmem:[%s161] sm:$0x2]
    %vm163 = vcmask 1041409
    %v164 = vsel %vm163, %v162, %v160
    %165 = vrot.lane.b32.xlu0 %v164, 64
    %v166 = vpop.permute.xlu0 %165
    %vm167 = vcmask 556544
    %168 = vst.msk [vmem:[#allocation0] ss:$8 sm:$0x3] %vm167, %v166
    %s169 = scalar_lea.vmem %s0, 15
    %v170 = vld [vmem:[%s169] sm:$0x1]
    %s171 = scalar_lea.vmem %s0, 46
    %v172 = vld [vmem:[%s171] sm:$0x2]
    %vm173 = vcmask 1041409
    %v174 = vsel %vm173, %v172, %v170
    %175 = vrot.lane.b32.xlu0 %v174, 60
    %v176 = vpop.permute.xlu0 %175
    %vm177 = vcmask 523744
    %178 = vst.msk [vmem:[#allocation0] ss:$8 sm:$0x3] %vm177, %v176
    %s179 = scalar_lea.vmem %s0, 14
    %v180 = vld [vmem:[%s179] sm:$0x1]
    %s181 = scalar_lea.vmem %s0, 45
    %v182 = vld [vmem:[%s181] sm:$0x2]
    %vm183 = vcmask 1041409
    %v184 = vsel %vm183, %v182, %v180
    %185 = vrot.lane.b32.xlu0 %v184, 56
    %v186 = vpop.permute.xlu0 %185
    %vm187 = vcmask 490944
    %188 = vst.msk [vmem:[#allocation0] ss:$8 sm:$0x3] %vm187, %v186
    %s189 = scalar_lea.vmem %s0, 13
    %v190 = vld [vmem:[%s189] sm:$0x1]
    %s191 = scalar_lea.vmem %s0, 44
    %v192 = vld [vmem:[%s191] sm:$0x2]
    %vm193 = vcmask 1041409
    %v194 = vsel %vm193, %v192, %v190
    %195 = vrot.lane.b32.xlu0 %v194, 52
    %v196 = vpop.permute.xlu0 %195
    %vm197 = vcmask 458144
    %198 = vst.msk [vmem:[#allocation0] ss:$8 sm:$0x3] %vm197, %v196
    %s199 = scalar_lea.vmem %s0, 12
    %v200 = vld [vmem:[%s199] sm:$0x1]
    %s201 = scalar_lea.vmem %s0, 43
    %v202 = vld [vmem:[%s201] sm:$0x2]
    %vm203 = vcmask 1041409
    %v204 = vsel %vm203, %v202, %v200
    %205 = vrot.lane.b32.xlu0 %v204, 48
    %v206 = vpop.permute.xlu0 %205
    %vm207 = vcmask 425344
    %208 = vst.msk [vmem:[#allocation0] ss:$8 sm:$0x3] %vm207, %v206
    %s209 = scalar_lea.vmem %s0, 11
    %v210 = vld [vmem:[%s209] sm:$0x1]
    %s211 = scalar_lea.vmem %s0, 42
    %v212 = vld [vmem:[%s211] sm:$0x2]
    %vm213 = vcmask 1041409
    %v214 = vsel %vm213, %v212, %v210
    %215 = vrot.lane.b32.xlu0 %v214, 44
    %v216 = vpop.permute.xlu0 %215
    %vm217 = vcmask 392544
    %218 = vst.msk [vmem:[#allocation0] ss:$8 sm:$0x3] %vm217, %v216
    %s219 = scalar_lea.vmem %s0, 10
    %v220 = vld [vmem:[%s219] sm:$0x1]
    %s221 = scalar_lea.vmem %s0, 41
    %v222 = vld [vmem:[%s221] sm:$0x2]
    %vm223 = vcmask 1041409
    %v224 = vsel %vm223, %v222, %v220
    %225 = vrot.lane.b32.xlu0 %v224, 40
    %v226 = vpop.permute.xlu0 %225
    %vm227 = vcmask 359744
    %228 = vst.msk [vmem:[#allocation0] ss:$8 sm:$0x3] %vm227, %v226
    %s229 = scalar_lea.vmem %s0, 9
    %v230 = vld [vmem:[%s229] sm:$0x1]
    %s231 = scalar_lea.vmem %s0, 40
    %v232 = vld [vmem:[%s231] sm:$0x2]
    %vm233 = vcmask 1041409
    %v234 = vsel %vm233, %v232, %v230
    %235 = vrot.lane.b32.xlu0 %v234, 36
    %v236 = vpop.permute.xlu0 %235
    %vm237 = vcmask 326944
    %238 = vst.msk [vmem:[#allocation0] ss:$8 sm:$0x3] %vm237, %v236
    %s239 = scalar_lea.vmem %s0, 8
    %v240 = vld [vmem:[%s239] sm:$0x1]
    %s241 = scalar_lea.vmem %s0, 39
    %v242 = vld [vmem:[%s241] sm:$0x2]
    %vm243 = vcmask 1041409
    %v244 = vsel %vm243, %v242, %v240
    %245 = vrot.lane.b32.xlu0 %v244, 32
    %v246 = vpop.permute.xlu0 %245
    %vm247 = vcmask 294144
    %248 = vst.msk [vmem:[#allocation0] ss:$8 sm:$0x3] %vm247, %v246
    %s249 = scalar_lea.vmem %s0, 7
    %v250 = vld [vmem:[%s249] sm:$0x1]
    %s251 = scalar_lea.vmem %s0, 38
    %v252 = vld [vmem:[%s251] sm:$0x2]
    %vm253 = vcmask 1041409
    %v254 = vsel %vm253, %v252, %v250
    %255 = vrot.lane.b32.xlu0 %v254, 28
    %v256 = vpop.permute.xlu0 %255
    %vm257 = vcmask 261344
    %258 = vst.msk [vmem:[#allocation0] ss:$8 sm:$0x3] %vm257, %v256
    %s259 = scalar_lea.vmem %s0, 6
    %v260 = vld [vmem:[%s259] sm:$0x1]
    %s261 = scalar_lea.vmem %s0, 37
    %v262 = vld [vmem:[%s261] sm:$0x2]
    %vm263 = vcmask 1041409
    %v264 = vsel %vm263, %v262, %v260
    %265 = vrot.lane.b32.xlu0 %v264, 24
    %v266 = vpop.permute.xlu0 %265
    %vm267 = vcmask 228544
    %268 = vst.msk [vmem:[#allocation0] ss:$8 sm:$0x3] %vm267, %v266
    %s269 = scalar_lea.vmem %s0, 5
    %v270 = vld [vmem:[%s269] sm:$0x1]
    %s271 = scalar_lea.vmem %s0, 36
    %v272 = vld [vmem:[%s271] sm:$0x2]
    %vm273 = vcmask 1041409
    %v274 = vsel %vm273, %v272, %v270
    %275 = vrot.lane.b32.xlu0 %v274, 20
    %v276 = vpop.permute.xlu0 %275
    %vm277 = vcmask 195744
    %278 = vst.msk [vmem:[#allocation0] ss:$8 sm:$0x3] %vm277, %v276
    %s279 = scalar_lea.vmem %s0, 4
    %v280 = vld [vmem:[%s279] sm:$0x1]
    %s281 = scalar_lea.vmem %s0, 35
    %v282 = vld [vmem:[%s281] sm:$0x2]
    %vm283 = vcmask 1041409
    %v284 = vsel %vm283, %v282, %v280
    %285 = vrot.lane.b32.xlu0 %v284, 16
    %v286 = vpop.permute.xlu0 %285
    %vm287 = vcmask 162944
    %288 = vst.msk [vmem:[#allocation0] ss:$8 sm:$0x3] %vm287, %v286
    %s289 = scalar_lea.vmem %s0, 3
    %v290 = vld [vmem:[%s289] sm:$0x1]
    %s291 = scalar_lea.vmem %s0, 34
    %v292 = vld [vmem:[%s291] sm:$0x2]
    %vm293 = vcmask 1041409
    %v294 = vsel %vm293, %v292, %v290
    %295 = vrot.lane.b32.xlu0 %v294, 12
    %v296 = vpop.permute.xlu0 %295
    %vm297 = vcmask 130144
    %298 = vst.msk [vmem:[#allocation0] ss:$8 sm:$0x3] %vm297, %v296
    %s299 = scalar_lea.vmem %s0, 2
    %v300 = vld [vmem:[%s299] sm:$0x1]
    %s301 = scalar_lea.vmem %s0, 33
    %v302 = vld [vmem:[%s301] sm:$0x2]
    %vm303 = vcmask 1041409
    %v304 = vsel %vm303, %v302, %v300
    %305 = vrot.lane.b32.xlu0 %v304, 8
    %v306 = vpop.permute.xlu0 %305
    %vm307 = vcmask 97344
    %308 = vst.msk [vmem:[#allocation0] ss:$8 sm:$0x3] %vm307, %v306
    %s309 = scalar_lea.vmem %s0, 1
    %v310 = vld [vmem:[%s309] sm:$0x1]
    %s311 = scalar_lea.vmem %s0, 32
    %v312 = vld [vmem:[%s311] sm:$0x2]
    %vm313 = vcmask 1041409
    %v314 = vsel %vm313, %v312, %v310
    %315 = vrot.lane.b32.xlu0 %v314, 4
    %v316 = vpop.permute.xlu0 %315
    %vm317 = vcmask 64544
    %318 = vst.msk [vmem:[#allocation0] ss:$8 sm:$0x3] %vm317, %v316
    %s320 = ssub.s32 2, 1
    %v321 = vld [vmem:[#allocation0] sm:%s320]
    %s323 = ssub.s32 2, 1
    %324 = vst [vmem:[%s1] sm:%s323] %v321
    %s325 = scalar_lea.vmem [#allocation0], 8
    %v326 = vld [vmem:[%s325] sm:%s320]
    %s328 = ssub.s32 2, 1
    %s329 = scalar_lea.vmem %s1, 1
    %330 = vst [vmem:[%s329] sm:%s328] %v326

// kernel: basic_block_forward.5
$region0: #{basic_block_forward.5}
  #allocation0 [shape = 'u32[]', space=smem, size = 0x4, offset = 0x4, fixed_abs, tag = 'smem constant byte address 0x4 - core index']
  #allocation1 [shape = 'u32[72,128]{1,0:T(1,128)}', space=vmem, size = 0x9000, scoped, tag = 'internal scratch']
  %s0 = inlined_call_operand.vmem [shape: bf16[16,256], index: 0, kind: input, shape index: {}]
  %s1 = inlined_call_operand.vmem [shape: f32[1,256], index: 1, kind: input, shape index: {}]
  %s2 = inlined_call_operand.vmem [shape: f32[1,256], index: 2, kind: input, shape index: {}]
  %s3 = inlined_call_operand.vmem [shape: bf16[16,256], index: 3, kind: output, shape index: {}]
  %s4 = sld [smem:[#allocation0]]
  $region22: #{basic_block_forward.5} parent=0
    _
  %s6 = ssub.s32 1, %s4
  %s7 = scalar_select 0, %s6, %s4
  // Predicated region
  $region2: #{basic_block_forward.5} parent=0 // pred_check
    _
  $region3: #{basic_block_forward.5} parent=0 // pred_check_branch
    %9 = sbr.rel (0) target = $region5
  $region4: #{basic_block_forward.5} parent=0 // pred_region
    _
  $region5: #{basic_block_forward.5} parent=0 // pred_fallthru
    _
  // Predicated region
  $region6: #{basic_block_forward.5} parent=0 // pred_check
    _
  $region7: #{basic_block_forward.5} parent=0 // pred_check_branch
    %11 = sbr.rel (0) target = $region9
  $region8: #{basic_block_forward.5} parent=0 // pred_region
    _
  $region9: #{basic_block_forward.5} parent=0 // pred_fallthru
    _
  // Predicated region
  $region10: #{basic_block_forward.5} parent=0 // pred_check
    _
  $region11: #{basic_block_forward.5} parent=0 // pred_check_branch
    %13 = sbr.rel (0) target = $region13
  $region12: #{basic_block_forward.5} parent=0 // pred_region
    _
  $region13: #{basic_block_forward.5} parent=0 // pred_fallthru
    _
  %v14 = vld [vmem:[%s0] sm:$0xff]
  %v15 = vld [vmem:[%s0 + $0x8] sm:$0xff]
  %v16 = vunpack.c.l.bf16 %v14
  %v17 = vunpack.c.h.bf16 %v14
  %v18 = vunpack.c.l.bf16 %v15
  %v19 = vunpack.c.h.bf16 %v15
  %v20 = vld [vmem:[%s1] sm:$0x3]
  %v22 = vperm.slane %v20, 0
  %v23 = vperm.slane %v20, 1
  %v26 = vmul.f32 %v16, %v22
  %v27 = vmul.f32 %v17, %v23
  %v28 = vmul.f32 %v18, %v22
  %v29 = vmul.f32 %v19, %v23
  %v30 = vld [vmem:[%s2] sm:$0x3]
  %v32 = vperm.slane %v30, 0
  %v33 = vperm.slane %v30, 1
  %v36 = vadd.f32 %v26, %v32
  %v37 = vadd.f32 %v27, %v33
  %v38 = vadd.f32 %v28, %v32
  %v39 = vadd.f32 %v29, %v33
  %v40 = vmax.f32 %v36, 0.0
  %v41 = vmax.f32 %v37, 0.0
  %v42 = vmax.f32 %v38, 0.0
  %v43 = vmax.f32 %v39, 0.0
  %v44 = vpack.c.bf16 %v41, %v40
  %v45 = vpack.c.bf16 %v43, %v42
  %46 = vst [vmem:[%s3] sm:$0xff] %v44
  %47 = vst [vmem:[%s3 + $0x8] sm:$0xff] %v45
  // Predicated region
  $region14: #{basic_block_forward.5} parent=0 // pred_check
    _
  $region15: #{basic_block_forward.5} parent=0 // pred_check_branch
    %49 = sbr.rel (0) target = $region17
  $region16: #{basic_block_forward.5} parent=0 // pred_region
    _
  $region17: #{basic_block_forward.5} parent=0 // pred_fallthru
    _
  // Predicated region
  $region18: #{basic_block_forward.5} parent=0 // pred_check
    _
  $region19: #{basic_block_forward.5} parent=0 // pred_check_branch
    %51 = sbr.rel (0) target = $region21
  $region20: #{basic_block_forward.5} parent=0 // pred_region
    _
  $region21: #{basic_block_forward.5} parent=0 // pred_fallthru
    _

// kernel: basic_block_forward.4
$region0: #{basic_block_forward.4}
  #allocation0 [shape = 'u32[]', space=smem, size = 0x4, offset = 0x4, fixed_abs, tag = 'smem constant byte address 0x4 - core index']
  #allocation1 [shape = 'u32[72,128]{1,0:T(1,128)}', space=vmem, size = 0x9000, scoped, tag = 'internal scratch']
  #allocation2 [shape = 'f32[64,4]{1,0:T(8,128)}', space=vmem, size = 0x8000, scoped, tag = 'scratch operand']
  %s0 = inlined_call_operand.vmem [shape: bf16[2,10,10,10,4], index: 0, kind: input, shape index: {}]
  %s1 = inlined_call_operand.vmem [shape: bf16[3,36,4], index: 1, kind: input, shape index: {}]
  %s2 = inlined_call_operand.vmem [shape: bf16[2,8,64,4], index: 2, kind: output, shape index: {0}]
  %s3 = inlined_call_operand.vmem [shape: f32[2,8,2,4], index: 3, kind: output, shape index: {1}]
  %4 = xla_tuple %s2, %s3
  %s5 = sld [smem:[#allocation0]]
  $region61: #{basic_block_forward.4} parent=0
    _
  %s7 = ssub.s32 1, %s5
  %s8 = scalar_select 0, %s7, %s5
  loop: start=0, step=1, limit=50
  $region2: #{basic_block_forward.4} parent=0 // loop_pre_header
    _
  $region3: #{basic_block_forward.4} parent=0 // loop_header
    %s10 = sphi 0, %s14
    %p11 = scmp.ge.s32.totalorder %s10, 50
    %s17 = sphi 0, %s36
    %s18 = sphi 0, %s32
    %s19 = sphi 0, %s28
    %s20 = sphi 0, %s17
    %s21 = sphi 0, %s18
    %s22 = sphi 0, %s19
    %s23 = sphi 0, %s20
    %s24 = sphi 0, %s21
    %s25 = sphi 0, %s22
    %s43 = sphi 0, %s45
    %s46 = sphi 0, %s43
    %s47 = sphi 0, %s46
    %s63 = sphi 0, %s47
    %s67 = sphi 0, %s67
    %s69 = sphi 0, %s67
    %s70 = sphi 0, %s69
    %s84 = sphi 0, %s70
    %s92 = sphi 0, %s94
    %s95 = sphi 0, %s92
    %s96 = sphi 0, %s95
    %s112 = sphi 0, %s96
    %s120 = sphi 0, %s122
    %s123 = sphi 0, %s120
    %s124 = sphi 0, %s123
    %s140 = sphi 0, %s124
  $region4: #{basic_block_forward.4} parent=0 // loop_header_branch
    %13 = sbr.rel (%p11) target = $region8
  $region5: #{basic_block_forward.4} parent=0 // loop_body
    %s15 = ssub.s32 %s10, 1
    %s16 = ssub.s32 %s10, 2
    %s26 = sadd.s32 1, %s19
    %p27 = scmp.ge.s32.totalorder %s26, 3
    %s28 = scalar_select %p27, 0, %s26
    %s29 = sadd.s32 1, %s18
    %s30 = scalar_select %p27, %s29, %s18
    %p31 = scmp.ge.s32.totalorder %s30, 8
    %s32 = scalar_select %p31, 0, %s30
    %s33 = sadd.s32 1, %s17
    %s34 = scalar_select %p31, %s33, %s17
    %p35 = scmp.ge.s32.totalorder %s34, 2
    %s36 = scalar_select %p35, 0, %s34
    %s37 = sadd.s32 %s18, %s19
    %s38 = sadd.s32 %s32, %s28
    %s39 = ssub.s32 %s17, %s36
    %s40 = ssub.s32 %s37, %s38
    %s41 = sor.u32 %s39, %s40
    %p42 = scmp.eq.s32.totalorder %s41, 0
    %s44 = sadd.s32 %s43, 1
    %s45 = scalar_select %p42, %s43, %s44
    %p48 = pneg %p42
    %p49 = scmp.eq.s32.totalorder %s10, 47
    %p50 = por %p48, %p49
    %p51 = scmp.ne.s32.totalorder %s43, %s46
    %p52 = scmp.eq.s32.totalorder %s10, 0
    %p53 = por %p51, %p52
    %p54 = scmp.ne.s32.totalorder %s43, %s46
    %p55 = scmp.eq.s32.totalorder %s15, 47
    %p56 = por %p54, %p55
    %p57 = scmp.ne.s32.totalorder %s46, %s47
    %p58 = scmp.eq.s32.totalorder %s15, 0
    %p59 = por %p57, %p58
    %p60 = scmp.ne.s32.totalorder %s46, %s47
    %p61 = scmp.eq.s32.totalorder %s16, 47
    %p62 = por %p60, %p61
    %p64 = scmp.ne.s32.totalorder %s47, %s63
    %p65 = scmp.eq.s32.totalorder %s16, 0
    %p66 = por %p64, %p65
    %s68 = sadd.s32 %s67, 1
    %p71 = scmp.eq.s32.totalorder %s10, 47
    %p72 = scmp.ne.s32.totalorder %s67, %s69
    %p73 = scmp.eq.s32.totalorder %s10, 0
    %p74 = por %p72, %p73
    %p75 = scmp.ne.s32.totalorder %s67, %s69
    %p76 = scmp.eq.s32.totalorder %s15, 47
    %p77 = por %p75, %p76
    %p78 = scmp.ne.s32.totalorder %s69, %s70
    %p79 = scmp.eq.s32.totalorder %s15, 0
    %p80 = por %p78, %p79
    %p81 = scmp.ne.s32.totalorder %s69, %s70
    %p82 = scmp.eq.s32.totalorder %s16, 47
    %p83 = por %p81, %p82
    %p85 = scmp.ne.s32.totalorder %s70, %s84
    %p86 = scmp.eq.s32.totalorder %s16, 0
    %p87 = por %p85, %p86
    %s88 = ssub.s32 %s17, %s36
    %s89 = ssub.s32 %s18, %s32
    %s90 = sor.u32 %s88, %s89
    %p91 = scmp.eq.s32.totalorder %s90, 0
    %s93 = sadd.s32 %s92, 1
    %s94 = scalar_select %p91, %s92, %s93
    %p97 = pneg %p91
    %p98 = scmp.eq.s32.totalorder %s10, 47
    %p99 = por %p97, %p98
    %p100 = scmp.ne.s32.totalorder %s92, %s95
    %p101 = scmp.eq.s32.totalorder %s10, 0
    %p102 = por %p100, %p101
    %p103 = scmp.ne.s32.totalorder %s92, %s95
    %p104 = scmp.eq.s32.totalorder %s15, 47
    %p105 = por %p103, %p104
    %p106 = scmp.ne.s32.totalorder %s95, %s96
    %p107 = scmp.eq.s32.totalorder %s15, 0
    %p108 = por %p106, %p107
    %p109 = scmp.ne.s32.totalorder %s95, %s96
    %p110 = scmp.eq.s32.totalorder %s16, 47
    %p111 = por %p109, %p110
    %p113 = scmp.ne.s32.totalorder %s96, %s112
    %p114 = scmp.eq.s32.totalorder %s16, 0
    %p115 = por %p113, %p114
    %s116 = ssub.s32 %s17, %s36
    %s117 = ssub.s32 %s18, %s32
    %s118 = sor.u32 %s116, %s117
    %p119 = scmp.eq.s32.totalorder %s118, 0
    %s121 = sadd.s32 %s120, 1
    %s122 = scalar_select %p119, %s120, %s121
    %p125 = pneg %p119
    %p126 = scmp.eq.s32.totalorder %s10, 47
    %p127 = por %p125, %p126
    %p128 = scmp.ne.s32.totalorder %s120, %s123
    %p129 = scmp.eq.s32.totalorder %s10, 0
    %p130 = por %p128, %p129
    %p131 = scmp.ne.s32.totalorder %s120, %s123
    %p132 = scmp.eq.s32.totalorder %s15, 47
    %p133 = por %p131, %p132
    %p134 = scmp.ne.s32.totalorder %s123, %s124
    %p135 = scmp.eq.s32.totalorder %s15, 0
    %p136 = por %p134, %p135
    %p137 = scmp.ne.s32.totalorder %s123, %s124
    %p138 = scmp.eq.s32.totalorder %s16, 47
    %p139 = por %p137, %p138
    %p141 = scmp.ne.s32.totalorder %s124, %s140
    %p142 = scmp.eq.s32.totalorder %s16, 0
    %p143 = por %p141, %p142
    %p144 = scmp.le.s32.totalorder 1, %s10
    %p145 = scmp.lt.s32.totalorder %s10, 49
    %p146 = pnand %p144, %p145
    %p147 = pneg %p146
    // Predicated region
    $region9: #{basic_block_forward.4} parent=5 // pred_check
      _
    $region10: #{basic_block_forward.4} parent=5 // pred_check_branch
      %149 = sbr.rel (%p146) target = $region12
    $region11: #{basic_block_forward.4} parent=5 // pred_region
      %s150 = ssub.s32 %s10, 1
      // Predicated region
      $region13: #{basic_block_forward.4} parent=11 // pred_check
        %p151 = pneg %p80
      $region14: #{basic_block_forward.4} parent=11 // pred_check_branch
        %153 = sbr.rel (%p151) target = $region16
      $region15: #{basic_block_forward.4} parent=11 // pred_region
        _
      $region16: #{basic_block_forward.4} parent=11 // pred_fallthru
        _
    $region12: #{basic_block_forward.4} parent=5 // pred_fallthru
      _
    %p154 = scmp.lt.s32.totalorder %s10, 48
    // Predicated region
    $region17: #{basic_block_forward.4} parent=5 // pred_check
      %p155 = pneg %p154
    $region18: #{basic_block_forward.4} parent=5 // pred_check_branch
      %157 = sbr.rel (%p155) target = $region20
    $region19: #{basic_block_forward.4} parent=5 // pred_region
      // Predicated region
      $region21: #{basic_block_forward.4} parent=19 // pred_check
        %p158 = pneg %p53
      $region22: #{basic_block_forward.4} parent=19 // pred_check_branch
        %160 = sbr.rel (%p158) target = $region24
      $region23: #{basic_block_forward.4} parent=19 // pred_region
        %s161 = sadd.s32 %s18, %s19
        %p162 = scmp.lt.s32.totalorder %s17, 1
        %s163 = scalar_select %p162, %s17, 1
        %p164 = scmp.lt.s32.totalorder %s161, 9
        %s165 = scalar_select %p164, %s161, 9
        %s166 = smul.addr %s165, 20
        %s167 = smul.addr %s163, 200
        %s168 = sadd.s32 %s166, %s167
        %s169 = smul.addr %s168, 4
        %s170 = scalar_lea.vmem %s0, %s169
        %s171 = sadd.s32 %s18, %s19
      $region24: #{basic_block_forward.4} parent=19 // pred_fallthru
        _
    $region20: #{basic_block_forward.4} parent=5 // pred_fallthru
      _
    %p172 = scmp.le.s32.totalorder 1, %s10
    %p173 = scmp.lt.s32.totalorder %s10, 49
    %p174 = pnand %p172, %p173
    %p175 = pneg %p174
    // Predicated region
    $region25: #{basic_block_forward.4} parent=5 // pred_check
      _
    $region26: #{basic_block_forward.4} parent=5 // pred_check_branch
      %177 = sbr.rel (%p174) target = $region28
    $region27: #{basic_block_forward.4} parent=5 // pred_region
      %s178 = ssub.s32 %s10, 1
      %s179 = sadd.s32 %s21, %s22
      %p180 = scmp.lt.s32.totalorder %s20, 1
      %s181 = scalar_select %p180, %s20, 1
      %p182 = scmp.lt.s32.totalorder %s179, 9
      %s183 = scalar_select %p182, %s179, 9
      %s184 = smul.addr %s183, 20
      %s185 = smul.addr %s181, 200
      %s186 = sadd.s32 %s184, %s185
      %s187 = smul.addr %s186, 4
      %s188 = scalar_lea.vmem %s0, %s187
      %p189 = pneg %p59
      %p190 = pneg %p56
      %p191 = pneg %p80
      %p192 = pneg %p77
      %p193 = pneg %p108
      %p194 = pneg %p105
      %p195 = scmp.lt.s32.totalorder %s20, 1
      %s196 = scalar_select %p195, %s20, 1
      %p197 = scmp.lt.s32.totalorder %s21, 7
      %s198 = scalar_select %p197, %s21, 7
      %s199 = smul.addr %s198, 8
      %s200 = smul.addr %s196, 64
      %s201 = sadd.s32 %s199, %s200
      %s202 = smul.addr %s201, 4
      %s203 = scalar_lea.vmem %s2, %s202
      %p204 = pneg %p136
      %p205 = pneg %p133
      %p206 = scmp.lt.s32.totalorder %s20, 1
      %s207 = scalar_select %p206, %s20, 1
      %p208 = scmp.lt.s32.totalorder %s21, 7
      %s209 = scalar_select %p208, %s21, 7
      %s210 = smul.addr %s207, 8
      %s211 = sadd.s32 %s209, %s210
      %s212 = smul.addr %s211, 2
      %s213 = scalar_lea.vmem %s3, %s212
      %s214 = sadd.s32 %s21, %s22
      %p215 = scmp.lt.s32.totalorder %s20, 1
      %s216 = scalar_select %p215, %s20, 1
      %p217 = scmp.lt.s32.totalorder %s214, 9
      %s218 = scalar_select %p217, %s214, 9
      %s219 = smul.addr %s218, 20
      %s220 = smul.addr %s216, 200
      %s221 = sadd.s32 %s219, %s220
      %s222 = smul.addr %s221, 4
      %s223 = scalar_lea.vmem %s0, %s222
      %s224 = sadd.s32 %s21, %s22
      %p225 = scmp.lt.s32.totalorder %s20, 1
      %s226 = scalar_select %p225, %s20, 1
      %p227 = scmp.lt.s32.totalorder %s21, 7
      %s228 = scalar_select %p227, %s21, 7
      %s229 = smul.addr %s228, 8
      %s230 = smul.addr %s226, 64
      %s231 = sadd.s32 %s229, %s230
      %s232 = smul.addr %s231, 4
      %s233 = scalar_lea.vmem %s2, %s232
      %p234 = scmp.lt.s32.totalorder %s20, 1
      %s235 = scalar_select %p234, %s20, 1
      %p236 = scmp.lt.s32.totalorder %s21, 7
      %s237 = scalar_select %p236, %s21, 7
      %s238 = smul.addr %s235, 8
      %s239 = sadd.s32 %s237, %s238
      %s240 = smul.addr %s239, 2
      %s241 = scalar_lea.vmem %s3, %s240
      %v243 = vld [vmem:[%s223] sm:$0xf]
      %v244 = vld [vmem:[%s223 + $0x8] sm:$0xf]
      %v245 = vld [vmem:[%s223 + $0x10] sm:$0xf]
      %v246 = vld [vmem:[%s223 + $0x18] sm:$0xf]
      %v247 = vld [vmem:[%s223 + $0x20] sm:$0xf]
      %v248 = vld [vmem:[%s223 + $0x28] sm:$0xf]
      %v249 = vld [vmem:[%s223 + $0x30] sm:$0xf]
      %v250 = vld [vmem:[%s223 + $0x38] sm:$0xf]
      %v251 = vld [vmem:[%s223 + $0x4] sm:$0x1]
      %v252 = vld [vmem:[%s223 + $0xc] sm:$0x1]
      %v253 = vld [vmem:[%s223 + $0x14] sm:$0x1]
      %v254 = vld [vmem:[%s223 + $0x1c] sm:$0x1]
      %v255 = vld [vmem:[%s223 + $0x24] sm:$0x1]
      %v256 = vld [vmem:[%s223 + $0x2c] sm:$0x1]
      %v257 = vld [vmem:[%s223 + $0x34] sm:$0x1]
      %v258 = vld [vmem:[%s223 + $0x3c] sm:$0x1]
      %v259 = vld [vmem:[%s223] sm:$0xe]
      %v260 = vld [vmem:[%s223 + $0x8] sm:$0xe]
      %v261 = vld [vmem:[%s223 + $0x10] sm:$0xe]
      %v262 = vld [vmem:[%s223 + $0x18] sm:$0xe]
      %v263 = vld [vmem:[%s223 + $0x20] sm:$0xe]
      %v264 = vld [vmem:[%s223 + $0x28] sm:$0xe]
      %v265 = vld [vmem:[%s223 + $0x30] sm:$0xe]
      %v266 = vld [vmem:[%s223 + $0x38] sm:$0xe]
      %s267 = scalar_lea.vmem %s223, 8
      %v268 = vld [vmem:[%s267] sm:$0xf]
      %v269 = vld [vmem:[%s267 + $0x8] sm:$0xf]
      %v270 = vld [vmem:[%s267 + $0x10] sm:$0xf]
      %v271 = vld [vmem:[%s267 + $0x18] sm:$0xf]
      %v272 = vld [vmem:[%s267 + $0x20] sm:$0xf]
      %v273 = vld [vmem:[%s267 + $0x28] sm:$0xf]
      %v274 = vld [vmem:[%s267 + $0x30] sm:$0xf]
      %v275 = vld [vmem:[%s267 + $0x38] sm:$0xf]
      %v276 = vld [vmem:[%s267 + $0x4] sm:$0x1]
      %v277 = vld [vmem:[%s267 + $0xc] sm:$0x1]
      %v278 = vld [vmem:[%s267 + $0x14] sm:$0x1]
      %v279 = vld [vmem:[%s267 + $0x1c] sm:$0x1]
      %v280 = vld [vmem:[%s267 + $0x24] sm:$0x1]
      %v281 = vld [vmem:[%s267 + $0x2c] sm:$0x1]
      %v282 = vld [vmem:[%s267 + $0x34] sm:$0x1]
      %v283 = vld [vmem:[%s267 + $0x3c] sm:$0x1]
      %v284 = vld [vmem:[%s267] sm:$0xe]
      %v285 = vld [vmem:[%s267 + $0x8] sm:$0xe]
      %v286 = vld [vmem:[%s267 + $0x10] sm:$0xe]
      %v287 = vld [vmem:[%s267 + $0x18] sm:$0xe]
      %v288 = vld [vmem:[%s267 + $0x20] sm:$0xe]
      %v289 = vld [vmem:[%s267 + $0x28] sm:$0xe]
      %v290 = vld [vmem:[%s267 + $0x30] sm:$0xe]
      %v291 = vld [vmem:[%s267 + $0x38] sm:$0xe]
      %s292 = scalar_lea.vmem %s223, 16
      %v293 = vld [vmem:[%s292] sm:$0xf]
      %v294 = vld [vmem:[%s292 + $0x8] sm:$0xf]
      %v295 = vld [vmem:[%s292 + $0x10] sm:$0xf]
      %v296 = vld [vmem:[%s292 + $0x18] sm:$0xf]
      %v297 = vld [vmem:[%s292 + $0x20] sm:$0xf]
      %v298 = vld [vmem:[%s292 + $0x28] sm:$0xf]
      %v299 = vld [vmem:[%s292 + $0x30] sm:$0xf]
      %v300 = vld [vmem:[%s292 + $0x38] sm:$0xf]
      %v301 = vld [vmem:[%s292 + $0x4] sm:$0x1]
      %v302 = vld [vmem:[%s292 + $0xc] sm:$0x1]
      %v303 = vld [vmem:[%s292 + $0x14] sm:$0x1]
      %v304 = vld [vmem:[%s292 + $0x1c] sm:$0x1]
      %v305 = vld [vmem:[%s292 + $0x24] sm:$0x1]
      %v306 = vld [vmem:[%s292 + $0x2c] sm:$0x1]
      %v307 = vld [vmem:[%s292 + $0x34] sm:$0x1]
      %v308 = vld [vmem:[%s292 + $0x3c] sm:$0x1]
      %v309 = vld [vmem:[%s292] sm:$0xe]
      %v310 = vld [vmem:[%s292 + $0x8] sm:$0xe]
      %v311 = vld [vmem:[%s292 + $0x10] sm:$0xe]
      %v312 = vld [vmem:[%s292 + $0x18] sm:$0xe]
      %v313 = vld [vmem:[%s292 + $0x20] sm:$0xe]
      %v314 = vld [vmem:[%s292 + $0x28] sm:$0xe]
      %v315 = vld [vmem:[%s292 + $0x30] sm:$0xe]
      %v316 = vld [vmem:[%s292 + $0x38] sm:$0xe]
      %v333 = vunpack.c.l.b16 %v243
      %v334 = vunpack.c.l.b16 %v251
      %v335 = vunpack.c.l.b16 %v244
      %v336 = vunpack.c.l.b16 %v252
      %v337 = vunpack.c.l.b16 %v245
      %v338 = vunpack.c.l.b16 %v253
      %v339 = vunpack.c.l.b16 %v246
      %v340 = vunpack.c.l.b16 %v254
      %v341 = vunpack.c.l.b16 %v247
      %v342 = vunpack.c.l.b16 %v255
      %v343 = vunpack.c.l.b16 %v248
      %v344 = vunpack.c.l.b16 %v256
      %v345 = vunpack.c.l.b16 %v249
      %v346 = vunpack.c.l.b16 %v257
      %v347 = vunpack.c.l.b16 %v250
      %v348 = vunpack.c.l.b16 %v258
      %v349 = vpack.c.b16 %v334, %v333
      %v350 = vpack.c.b16 %v336, %v335
      %v351 = vpack.c.b16 %v338, %v337
      %v352 = vpack.c.b16 %v340, %v339
      %v353 = vpack.c.b16 %v342, %v341
      %v354 = vpack.c.b16 %v344, %v343
      %v355 = vpack.c.b16 %v346, %v345
      %v356 = vpack.c.b16 %v348, %v347
      %v358 = vshrl.u32 %v349, 16
      %v360 = vshll.u32 %v349, 16
      %v362 = vrot.slane %v360, 1
      %v363 = vor.u32 %v358, %v362
      %v365 = vshrl.u32 %v350, 16
      %v367 = vshll.u32 %v350, 16
      %v369 = vrot.slane %v367, 1
      %v370 = vor.u32 %v365, %v369
      %v372 = vshrl.u32 %v351, 16
      %v374 = vshll.u32 %v351, 16
      %v376 = vrot.slane %v374, 1
      %v377 = vor.u32 %v372, %v376
      %v379 = vshrl.u32 %v352, 16
      %v381 = vshll.u32 %v352, 16
      %v383 = vrot.slane %v381, 1
      %v384 = vor.u32 %v379, %v383
      %v386 = vshrl.u32 %v353, 16
      %v388 = vshll.u32 %v353, 16
      %v390 = vrot.slane %v388, 1
      %v391 = vor.u32 %v386, %v390
      %v393 = vshrl.u32 %v354, 16
      %v395 = vshll.u32 %v354, 16
      %v397 = vrot.slane %v395, 1
      %v398 = vor.u32 %v393, %v397
      %v400 = vshrl.u32 %v355, 16
      %v402 = vshll.u32 %v355, 16
      %v404 = vrot.slane %v402, 1
      %v405 = vor.u32 %v400, %v404
      %v407 = vshrl.u32 %v356, 16
      %v409 = vshll.u32 %v356, 16
      %v411 = vrot.slane %v409, 1
      %v412 = vor.u32 %v407, %v411
      %413 = vrot.lane.b32.xlu0 %v363, 4
      %v414 = vpop.permute.xlu0 %413
      %415 = vrot.lane.b32.xlu0 %v370, 4
      %v416 = vpop.permute.xlu0 %415
      %417 = vrot.lane.b32.xlu0 %v377, 4
      %v418 = vpop.permute.xlu0 %417
      %419 = vrot.lane.b32.xlu0 %v384, 4
      %v420 = vpop.permute.xlu0 %419
      %421 = vrot.lane.b32.xlu0 %v391, 4
      %v422 = vpop.permute.xlu0 %421
      %423 = vrot.lane.b32.xlu0 %v398, 4
      %v424 = vpop.permute.xlu0 %423
      %425 = vrot.lane.b32.xlu0 %v405, 4
      %v426 = vpop.permute.xlu0 %425
      %427 = vrot.lane.b32.xlu0 %v412, 4
      %v428 = vpop.permute.xlu0 %427
      %v437 = vunpack.c.l.b16 %v259
      %v438 = vunpack.c.l.b16 %v260
      %v439 = vunpack.c.l.b16 %v261
      %v440 = vunpack.c.l.b16 %v262
      %v441 = vunpack.c.l.b16 %v263
      %v442 = vunpack.c.l.b16 %v264
      %v443 = vunpack.c.l.b16 %v265
      %v444 = vunpack.c.l.b16 %v266
      %v445 = vpack.c.b16 %v334, %v437
      %v446 = vpack.c.b16 %v336, %v438
      %v447 = vpack.c.b16 %v338, %v439
      %v448 = vpack.c.b16 %v340, %v440
      %v449 = vpack.c.b16 %v342, %v441
      %v450 = vpack.c.b16 %v344, %v442
      %v451 = vpack.c.b16 %v346, %v443
      %v452 = vpack.c.b16 %v348, %v444
      %v453 = vrot.slane %v445, 1
      %v454 = vrot.slane %v446, 1
      %v455 = vrot.slane %v447, 1
      %v456 = vrot.slane %v448, 1
      %v457 = vrot.slane %v449, 1
      %v458 = vrot.slane %v450, 1
      %v459 = vrot.slane %v451, 1
      %v460 = vrot.slane %v452, 1
      %461 = vrot.lane.b32.xlu0 %v453, 8
      %v462 = vpop.permute.xlu0 %461
      %463 = vrot.lane.b32.xlu0 %v454, 8
      %v464 = vpop.permute.xlu0 %463
      %465 = vrot.lane.b32.xlu0 %v455, 8
      %v466 = vpop.permute.xlu0 %465
      %467 = vrot.lane.b32.xlu0 %v456, 8
      %v468 = vpop.permute.xlu0 %467
      %469 = vrot.lane.b32.xlu0 %v457, 8
      %v470 = vpop.permute.xlu0 %469
      %471 = vrot.lane.b32.xlu0 %v458, 8
      %v472 = vpop.permute.xlu0 %471
      %473 = vrot.lane.b32.xlu0 %v459, 8
      %v474 = vpop.permute.xlu0 %473
      %475 = vrot.lane.b32.xlu0 %v460, 8
      %v476 = vpop.permute.xlu0 %475
      %v485 = vunpack.c.l.b16 %v268
      %v486 = vunpack.c.l.b16 %v269
      %v487 = vunpack.c.l.b16 %v270
      %v488 = vunpack.c.l.b16 %v271
      %v489 = vunpack.c.l.b16 %v272
      %v490 = vunpack.c.l.b16 %v273
      %v491 = vunpack.c.l.b16 %v274
      %v492 = vunpack.c.l.b16 %v275
      %v493 = vpack.c.b16 %v485, %v485
      %v494 = vpack.c.b16 %v486, %v486
      %v495 = vpack.c.b16 %v487, %v487
      %v496 = vpack.c.b16 %v488, %v488
      %v497 = vpack.c.b16 %v489, %v489
      %v498 = vpack.c.b16 %v490, %v490
      %v499 = vpack.c.b16 %v491, %v491
      %v500 = vpack.c.b16 %v492, %v492
      %501 = vrot.lane.b32.xlu0 %v493, 12
      %v502 = vpop.permute.xlu0 %501
      %503 = vrot.lane.b32.xlu0 %v494, 12
      %v504 = vpop.permute.xlu0 %503
      %505 = vrot.lane.b32.xlu0 %v495, 12
      %v506 = vpop.permute.xlu0 %505
      %507 = vrot.lane.b32.xlu0 %v496, 12
      %v508 = vpop.permute.xlu0 %507
      %509 = vrot.lane.b32.xlu0 %v497, 12
      %v510 = vpop.permute.xlu0 %509
      %511 = vrot.lane.b32.xlu0 %v498, 12
      %v512 = vpop.permute.xlu0 %511
      %513 = vrot.lane.b32.xlu0 %v499, 12
      %v514 = vpop.permute.xlu0 %513
      %515 = vrot.lane.b32.xlu0 %v500, 12
      %v516 = vpop.permute.xlu0 %515
      %v525 = vunpack.c.l.b16 %v276
      %v526 = vunpack.c.l.b16 %v277
      %v527 = vunpack.c.l.b16 %v278
      %v528 = vunpack.c.l.b16 %v279
      %v529 = vunpack.c.l.b16 %v280
      %v530 = vunpack.c.l.b16 %v281
      %v531 = vunpack.c.l.b16 %v282
      %v532 = vunpack.c.l.b16 %v283
      %v533 = vpack.c.b16 %v525, %v485
      %v534 = vpack.c.b16 %v526, %v486
      %v535 = vpack.c.b16 %v527, %v487
      %v536 = vpack.c.b16 %v528, %v488
      %v537 = vpack.c.b16 %v529, %v489
      %v538 = vpack.c.b16 %v530, %v490
      %v539 = vpack.c.b16 %v531, %v491
      %v540 = vpack.c.b16 %v532, %v492
      %v542 = vshrl.u32 %v533, 16
      %v544 = vshll.u32 %v533, 16
      %v546 = vrot.slane %v544, 1
      %v547 = vor.u32 %v542, %v546
      %v549 = vshrl.u32 %v534, 16
      %v551 = vshll.u32 %v534, 16
      %v553 = vrot.slane %v551, 1
      %v554 = vor.u32 %v549, %v553
      %v556 = vshrl.u32 %v535, 16
      %v558 = vshll.u32 %v535, 16
      %v560 = vrot.slane %v558, 1
      %v561 = vor.u32 %v556, %v560
      %v563 = vshrl.u32 %v536, 16
      %v565 = vshll.u32 %v536, 16
      %v567 = vrot.slane %v565, 1
      %v568 = vor.u32 %v563, %v567
      %v570 = vshrl.u32 %v537, 16
      %v572 = vshll.u32 %v537, 16
      %v574 = vrot.slane %v572, 1
      %v575 = vor.u32 %v570, %v574
      %v577 = vshrl.u32 %v538, 16
      %v579 = vshll.u32 %v538, 16
      %v581 = vrot.slane %v579, 1
      %v582 = vor.u32 %v577, %v581
      %v584 = vshrl.u32 %v539, 16
      %v586 = vshll.u32 %v539, 16
      %v588 = vrot.slane %v586, 1
      %v589 = vor.u32 %v584, %v588
      %v591 = vshrl.u32 %v540, 16
      %v593 = vshll.u32 %v540, 16
      %v595 = vrot.slane %v593, 1
      %v596 = vor.u32 %v591, %v595
      %597 = vrot.lane.b32.xlu0 %v547, 16
      %v598 = vpop.permute.xlu0 %597
      %599 = vrot.lane.b32.xlu0 %v554, 16
      %v600 = vpop.permute.xlu0 %599
      %601 = vrot.lane.b32.xlu0 %v561, 16
      %v602 = vpop.permute.xlu0 %601
      %603 = vrot.lane.b32.xlu0 %v568, 16
      %v604 = vpop.permute.xlu0 %603
      %605 = vrot.lane.b32.xlu0 %v575, 16
      %v606 = vpop.permute.xlu0 %605
      %607 = vrot.lane.b32.xlu0 %v582, 16
      %v608 = vpop.permute.xlu0 %607
      %609 = vrot.lane.b32.xlu0 %v589, 16
      %v610 = vpop.permute.xlu0 %609
      %611 = vrot.lane.b32.xlu0 %v596, 16
      %v612 = vpop.permute.xlu0 %611
      %v621 = vunpack.c.l.b16 %v284
      %v622 = vunpack.c.l.b16 %v285
      %v623 = vunpack.c.l.b16 %v286
      %v624 = vunpack.c.l.b16 %v287
      %v625 = vunpack.c.l.b16 %v288
      %v626 = vunpack.c.l.b16 %v289
      %v627 = vunpack.c.l.b16 %v290
      %v628 = vunpack.c.l.b16 %v291
      %v629 = vpack.c.b16 %v525, %v621
      %v630 = vpack.c.b16 %v526, %v622
      %v631 = vpack.c.b16 %v527, %v623
      %v632 = vpack.c.b16 %v528, %v624
      %v633 = vpack.c.b16 %v529, %v625
      %v634 = vpack.c.b16 %v530, %v626
      %v635 = vpack.c.b16 %v531, %v627
      %v636 = vpack.c.b16 %v532, %v628
      %v637 = vrot.slane %v629, 1
      %v638 = vrot.slane %v630, 1
      %v639 = vrot.slane %v631, 1
      %v640 = vrot.slane %v632, 1
      %v641 = vrot.slane %v633, 1
      %v642 = vrot.slane %v634, 1
      %v643 = vrot.slane %v635, 1
      %v644 = vrot.slane %v636, 1
      %645 = vrot.lane.b32.xlu0 %v637, 20
      %v646 = vpop.permute.xlu0 %645
      %647 = vrot.lane.b32.xlu0 %v638, 20
      %v648 = vpop.permute.xlu0 %647
      %649 = vrot.lane.b32.xlu0 %v639, 20
      %v650 = vpop.permute.xlu0 %649
      %651 = vrot.lane.b32.xlu0 %v640, 20
      %v652 = vpop.permute.xlu0 %651
      %653 = vrot.lane.b32.xlu0 %v641, 20
      %v654 = vpop.permute.xlu0 %653
      %655 = vrot.lane.b32.xlu0 %v642, 20
      %v656 = vpop.permute.xlu0 %655
      %657 = vrot.lane.b32.xlu0 %v643, 20
      %v658 = vpop.permute.xlu0 %657
      %659 = vrot.lane.b32.xlu0 %v644, 20
      %v660 = vpop.permute.xlu0 %659
      %v669 = vunpack.c.l.b16 %v293
      %v670 = vunpack.c.l.b16 %v294
      %v671 = vunpack.c.l.b16 %v295
      %v672 = vunpack.c.l.b16 %v296
      %v673 = vunpack.c.l.b16 %v297
      %v674 = vunpack.c.l.b16 %v298
      %v675 = vunpack.c.l.b16 %v299
      %v676 = vunpack.c.l.b16 %v300
      %v677 = vpack.c.b16 %v669, %v669
      %v678 = vpack.c.b16 %v670, %v670
      %v679 = vpack.c.b16 %v671, %v671
      %v680 = vpack.c.b16 %v672, %v672
      %v681 = vpack.c.b16 %v673, %v673
      %v682 = vpack.c.b16 %v674, %v674
      %v683 = vpack.c.b16 %v675, %v675
      %v684 = vpack.c.b16 %v676, %v676
      %685 = vrot.lane.b32.xlu0 %v677, 24
      %v686 = vpop.permute.xlu0 %685
      %687 = vrot.lane.b32.xlu0 %v678, 24
      %v688 = vpop.permute.xlu0 %687
      %689 = vrot.lane.b32.xlu0 %v679, 24
      %v690 = vpop.permute.xlu0 %689
      %691 = vrot.lane.b32.xlu0 %v680, 24
      %v692 = vpop.permute.xlu0 %691
      %693 = vrot.lane.b32.xlu0 %v681, 24
      %v694 = vpop.permute.xlu0 %693
      %695 = vrot.lane.b32.xlu0 %v682, 24
      %v696 = vpop.permute.xlu0 %695
      %697 = vrot.lane.b32.xlu0 %v683, 24
      %v698 = vpop.permute.xlu0 %697
      %699 = vrot.lane.b32.xlu0 %v684, 24
      %v700 = vpop.permute.xlu0 %699
      %v709 = vunpack.c.l.b16 %v301
      %v710 = vunpack.c.l.b16 %v302
      %v711 = vunpack.c.l.b16 %v303
      %v712 = vunpack.c.l.b16 %v304
      %v713 = vunpack.c.l.b16 %v305
      %v714 = vunpack.c.l.b16 %v306
      %v715 = vunpack.c.l.b16 %v307
      %v716 = vunpack.c.l.b16 %v308
      %v717 = vpack.c.b16 %v709, %v669
      %v718 = vpack.c.b16 %v710, %v670
      %v719 = vpack.c.b16 %v711, %v671
      %v720 = vpack.c.b16 %v712, %v672
      %v721 = vpack.c.b16 %v713, %v673
      %v722 = vpack.c.b16 %v714, %v674
      %v723 = vpack.c.b16 %v715, %v675
      %v724 = vpack.c.b16 %v716, %v676
      %v726 = vshrl.u32 %v717, 16
      %v728 = vshll.u32 %v717, 16
      %v730 = vrot.slane %v728, 1
      %v731 = vor.u32 %v726, %v730
      %v733 = vshrl.u32 %v718, 16
      %v735 = vshll.u32 %v718, 16
      %v737 = vrot.slane %v735, 1
      %v738 = vor.u32 %v733, %v737
      %v740 = vshrl.u32 %v719, 16
      %v742 = vshll.u32 %v719, 16
      %v744 = vrot.slane %v742, 1
      %v745 = vor.u32 %v740, %v744
      %v747 = vshrl.u32 %v720, 16
      %v749 = vshll.u32 %v720, 16
      %v751 = vrot.slane %v749, 1
      %v752 = vor.u32 %v747, %v751
      %v754 = vshrl.u32 %v721, 16
      %v756 = vshll.u32 %v721, 16
      %v758 = vrot.slane %v756, 1
      %v759 = vor.u32 %v754, %v758
      %v761 = vshrl.u32 %v722, 16
      %v763 = vshll.u32 %v722, 16
      %v765 = vrot.slane %v763, 1
      %v766 = vor.u32 %v761, %v765
      %v768 = vshrl.u32 %v723, 16
      %v770 = vshll.u32 %v723, 16
      %v772 = vrot.slane %v770, 1
      %v773 = vor.u32 %v768, %v772
      %v775 = vshrl.u32 %v724, 16
      %v777 = vshll.u32 %v724, 16
      %v779 = vrot.slane %v777, 1
      %v780 = vor.u32 %v775, %v779
      %781 = vrot.lane.b32.xlu0 %v731, 28
      %v782 = vpop.permute.xlu0 %781
      %783 = vrot.lane.b32.xlu0 %v738, 28
      %v784 = vpop.permute.xlu0 %783
      %785 = vrot.lane.b32.xlu0 %v745, 28
      %v786 = vpop.permute.xlu0 %785
      %787 = vrot.lane.b32.xlu0 %v752, 28
      %v788 = vpop.permute.xlu0 %787
      %789 = vrot.lane.b32.xlu0 %v759, 28
      %v790 = vpop.permute.xlu0 %789
      %791 = vrot.lane.b32.xlu0 %v766, 28
      %v792 = vpop.permute.xlu0 %791
      %793 = vrot.lane.b32.xlu0 %v773, 28
      %v794 = vpop.permute.xlu0 %793
      %795 = vrot.lane.b32.xlu0 %v780, 28
      %v796 = vpop.permute.xlu0 %795
      %v805 = vunpack.c.l.b16 %v309
      %v806 = vunpack.c.l.b16 %v310
      %v807 = vunpack.c.l.b16 %v311
      %v808 = vunpack.c.l.b16 %v312
      %v809 = vunpack.c.l.b16 %v313
      %v810 = vunpack.c.l.b16 %v314
      %v811 = vunpack.c.l.b16 %v315
      %v812 = vunpack.c.l.b16 %v316
      %v813 = vpack.c.b16 %v709, %v805
      %v814 = vpack.c.b16 %v710, %v806
      %v815 = vpack.c.b16 %v711, %v807
      %v816 = vpack.c.b16 %v712, %v808
      %v817 = vpack.c.b16 %v713, %v809
      %v818 = vpack.c.b16 %v714, %v810
      %v819 = vpack.c.b16 %v715, %v811
      %v820 = vpack.c.b16 %v716, %v812
      %v821 = vrot.slane %v813, 1
      %v822 = vrot.slane %v814, 1
      %v823 = vrot.slane %v815, 1
      %v824 = vrot.slane %v816, 1
      %v825 = vrot.slane %v817, 1
      %v826 = vrot.slane %v818, 1
      %v827 = vrot.slane %v819, 1
      %v828 = vrot.slane %v820, 1
      %829 = vrot.lane.b32.xlu0 %v821, 32
      %v830 = vpop.permute.xlu0 %829
      %831 = vrot.lane.b32.xlu0 %v822, 32
      %v832 = vpop.permute.xlu0 %831
      %833 = vrot.lane.b32.xlu0 %v823, 32
      %v834 = vpop.permute.xlu0 %833
      %835 = vrot.lane.b32.xlu0 %v824, 32
      %v836 = vpop.permute.xlu0 %835
      %837 = vrot.lane.b32.xlu0 %v825, 32
      %v838 = vpop.permute.xlu0 %837
      %839 = vrot.lane.b32.xlu0 %v826, 32
      %v840 = vpop.permute.xlu0 %839
      %841 = vrot.lane.b32.xlu0 %v827, 32
      %v842 = vpop.permute.xlu0 %841
      %843 = vrot.lane.b32.xlu0 %v828, 32
      %v844 = vpop.permute.xlu0 %843
      %vm845 = vcmask 31744
      %v848 = vsel %vm845, %v243, %v414
      %v851 = vsel %vm845, %v244, %v416
      %v854 = vsel %vm845, %v245, %v418
      %v857 = vsel %vm845, %v246, %v420
      %v860 = vsel %vm845, %v247, %v422
      %v863 = vsel %vm845, %v248, %v424
      %v866 = vsel %vm845, %v249, %v426
      %v869 = vsel %vm845, %v250, %v428
      %vm870 = vcmask 64512
      %v872 = vsel %vm870, %v848, %v462
      %v874 = vsel %vm870, %v851, %v464
      %v876 = vsel %vm870, %v854, %v466
      %v878 = vsel %vm870, %v857, %v468
      %v880 = vsel %vm870, %v860, %v470
      %v882 = vsel %vm870, %v863, %v472
      %v884 = vsel %vm870, %v866, %v474
      %v886 = vsel %vm870, %v869, %v476
      %vm887 = vcmask 97280
      %v889 = vsel %vm887, %v872, %v502
      %v891 = vsel %vm887, %v874, %v504
      %v893 = vsel %vm887, %v876, %v506
      %v895 = vsel %vm887, %v878, %v508
      %v897 = vsel %vm887, %v880, %v510
      %v899 = vsel %vm887, %v882, %v512
      %v901 = vsel %vm887, %v884, %v514
      %v903 = vsel %vm887, %v886, %v516
      %vm904 = vcmask 130048
      %v906 = vsel %vm904, %v889, %v598
      %v908 = vsel %vm904, %v891, %v600
      %v910 = vsel %vm904, %v893, %v602
      %v912 = vsel %vm904, %v895, %v604
      %v914 = vsel %vm904, %v897, %v606
      %v916 = vsel %vm904, %v899, %v608
      %v918 = vsel %vm904, %v901, %v610
      %v920 = vsel %vm904, %v903, %v612
      %vm921 = vcmask 162816
      %v923 = vsel %vm921, %v906, %v646
      %v925 = vsel %vm921, %v908, %v648
      %v927 = vsel %vm921, %v910, %v650
      %v929 = vsel %vm921, %v912, %v652
      %v931 = vsel %vm921, %v914, %v654
      %v933 = vsel %vm921, %v916, %v656
      %v935 = vsel %vm921, %v918, %v658
      %v937 = vsel %vm921, %v920, %v660
      %vm938 = vcmask 195584
      %v940 = vsel %vm938, %v923, %v686
      %v942 = vsel %vm938, %v925, %v688
      %v944 = vsel %vm938, %v927, %v690
      %v946 = vsel %vm938, %v929, %v692
      %v948 = vsel %vm938, %v931, %v694
      %v950 = vsel %vm938, %v933, %v696
      %v952 = vsel %vm938, %v935, %v698
      %v954 = vsel %vm938, %v937, %v700
      %vm955 = vcmask 228352
      %v957 = vsel %vm955, %v940, %v782
      %v959 = vsel %vm955, %v942, %v784
      %v961 = vsel %vm955, %v944, %v786
      %v963 = vsel %vm955, %v946, %v788
      %v965 = vsel %vm955, %v948, %v790
      %v967 = vsel %vm955, %v950, %v792
      %v969 = vsel %vm955, %v952, %v794
      %v971 = vsel %vm955, %v954, %v796
      %vm972 = vcmask 261120
      %v974 = vsel %vm972, %v957, %v830
      %v976 = vsel %vm972, %v959, %v832
      %v978 = vsel %vm972, %v961, %v834
      %v980 = vsel %vm972, %v963, %v836
      %v982 = vsel %vm972, %v965, %v838
      %v984 = vsel %vm972, %v967, %v840
      %v986 = vsel %vm972, %v969, %v842
      %v988 = vsel %vm972, %v971, %v844
      %s989 = smul.u32 %s22, 5
      %s990 = smul.addr %s989, 4
      %s991 = scalar_lea.vmem %s1, %s990
      %v992 = vld [vmem:[%s991] sm:$0xf]
      %v993 = vld [vmem:[%s991 + $0x4] sm:$0xf]
      %v994 = vld [vmem:[%s991 + $0x8] sm:$0xf]
      %v995 = vld [vmem:[%s991 + $0xc] sm:$0xf]
      %v996 = vld [vmem:[%s991 + $0x10] sm:$0x3]
      %v1005 = vunpack.c.l.b16 %v974
      %v1006 = vunpack.c.l.b16 %v976
      %v1007 = vunpack.c.l.b16 %v978
      %v1008 = vunpack.c.l.b16 %v980
      %v1009 = vunpack.c.l.b16 %v982
      %v1010 = vunpack.c.l.b16 %v984
      %v1011 = vunpack.c.l.b16 %v986
      %v1012 = vunpack.c.l.b16 %v988
      %v1013 = vpack.c.b16 %v1006, %v1005
      %v1014 = vpack.c.b16 %v1008, %v1007
      %v1015 = vpack.c.b16 %v1010, %v1009
      %v1016 = vpack.c.b16 %v1012, %v1011
      %v1022 = vunpack.c.l.b16 %v992
      %v1023 = vunpack.c.l.b16 %v993
      %v1024 = vunpack.c.l.b16 %v994
      %v1025 = vunpack.c.l.b16 %v995
      %v1026 = vunpack.c.l.b16 %v996
      %v1027 = vpack.c.b16 %v1023, %v1022
      %v1028 = vpack.c.b16 %v1025, %v1024
      %v1029 = vpack.c.b16 %v1026, %v1026
      %vm1032 = vcmask 293888
      %v1034 = vsel %vm1032, %v1013, 0
      %v1037 = vsel %vm1032, %v1014, 0
      %v1040 = vsel %vm1032, %v1015, 0
      %v1043 = vsel %vm1032, %v1016, 0
      %vm1045 = vcmask 1041408
      %v1047 = vsel %vm1045, %v1029, 0
      %1049 = vmatpush.bf16.msra.mxu0 0
      %1050 = vmatpush.bf16.msra.mxu0 0
      %1051 = vmatpush.bf16.msra.mxu0 0
      %1052 = vmatpush.bf16.msra.mxu0 0
      %1053 = vmatpush.bf16.msra.mxu0 0
      %1054 = vmatpush.bf16.msra.mxu0 %v1047
      %1055 = vmatpush.bf16.msra.mxu0 %v1028
      %1056 = vmatpush.bf16.msra.mxu0 %v1027
      %1057 = vmatmul.bf16.gmra.mxu0 %v1034
      %v1058 = vpop.f32.mrf.mxu0
      %v1059 = vadd.f32 0.0, %v1058
      %v1060 = vpop.f32.mrf.mxu0
      %v1061 = vadd.f32 0.0, %v1060
      %1062 = vmatmul.bf16.gmra.mxu0 %v1037
      %v1063 = vpop.f32.mrf.mxu0
      %v1064 = vadd.f32 0.0, %v1063
      %v1065 = vpop.f32.mrf.mxu0
      %v1066 = vadd.f32 0.0, %v1065
      %1067 = vmatmul.bf16.gmra.mxu0 %v1040
      %v1068 = vpop.f32.mrf.mxu0
      %v1069 = vadd.f32 0.0, %v1068
      %v1070 = vpop.f32.mrf.mxu0
      %v1071 = vadd.f32 0.0, %v1070
      %1072 = vmatmul.bf16.gmra.mxu0 %v1043
      %v1073 = vpop.f32.mrf.mxu0
      %v1074 = vadd.f32 0.0, %v1073
      %v1075 = vpop.f32.mrf.mxu0
      %v1076 = vadd.f32 0.0, %v1075
      %1077 = vdwg.mxu0
      %p1078 = scmp.eq.s32.totalorder %s22, 0
      // Predicated region
      $region29: #{basic_block_forward.4} parent=27 // pred_check
        %p1079 = pneg %p1078
      $region30: #{basic_block_forward.4} parent=27 // pred_check_branch
        %1081 = sbr.rel (%p1079) target = $region32
      $region31: #{basic_block_forward.4} parent=27 // pred_region
        %1082 = vst.msk [vmem:[#allocation2] sm:$0xff] %vm845, %v1059
        %1083 = vst.msk [vmem:[#allocation2 + $0x8] sm:$0xff] %vm845, %v1061
        %1084 = vst.msk [vmem:[#allocation2 + $0x10] sm:$0xff] %vm845, %v1064
        %1085 = vst.msk [vmem:[#allocation2 + $0x18] sm:$0xff] %vm845, %v1066
        %1086 = vst.msk [vmem:[#allocation2 + $0x20] sm:$0xff] %vm845, %v1069
        %1087 = vst.msk [vmem:[#allocation2 + $0x28] sm:$0xff] %vm845, %v1071
        %1088 = vst.msk [vmem:[#allocation2 + $0x30] sm:$0xff] %vm845, %v1074
        %1089 = vst.msk [vmem:[#allocation2 + $0x38] sm:$0xff] %vm845, %v1076
      $region32: #{basic_block_forward.4} parent=27 // pred_fallthru
        _
      %p1090 = scmp.gt.s32.totalorder %s22, 0
      // Predicated region
      $region33: #{basic_block_forward.4} parent=27 // pred_check
        %p1091 = pneg %p1090
      $region34: #{basic_block_forward.4} parent=27 // pred_check_branch
        %1093 = sbr.rel (%p1091) target = $region36
      $region35: #{basic_block_forward.4} parent=27 // pred_region
        %v1094 = vld [vmem:[#allocation2] sm:$0xff]
        %v1095 = vld [vmem:[#allocation2 + $0x8] sm:$0xff]
        %v1096 = vld [vmem:[#allocation2 + $0x10] sm:$0xff]
        %v1097 = vld [vmem:[#allocation2 + $0x18] sm:$0xff]
        %v1098 = vld [vmem:[#allocation2 + $0x20] sm:$0xff]
        %v1099 = vld [vmem:[#allocation2 + $0x28] sm:$0xff]
        %v1100 = vld [vmem:[#allocation2 + $0x30] sm:$0xff]
        %v1101 = vld [vmem:[#allocation2 + $0x38] sm:$0xff]
        %v1102 = vadd.f32 %v1094, %v1059
        %v1103 = vadd.f32 %v1095, %v1061
        %v1104 = vadd.f32 %v1096, %v1064
        %v1105 = vadd.f32 %v1097, %v1066
        %v1106 = vadd.f32 %v1098, %v1069
        %v1107 = vadd.f32 %v1099, %v1071
        %v1108 = vadd.f32 %v1100, %v1074
        %v1109 = vadd.f32 %v1101, %v1076
        %1110 = vst.msk [vmem:[#allocation2] sm:$0xff] %vm845, %v1102
        %1111 = vst.msk [vmem:[#allocation2 + $0x8] sm:$0xff] %vm845, %v1103
        %1112 = vst.msk [vmem:[#allocation2 + $0x10] sm:$0xff] %vm845, %v1104
        %1113 = vst.msk [vmem:[#allocation2 + $0x18] sm:$0xff] %vm845, %v1105
        %1114 = vst.msk [vmem:[#allocation2 + $0x20] sm:$0xff] %vm845, %v1106
        %1115 = vst.msk [vmem:[#allocation2 + $0x28] sm:$0xff] %vm845, %v1107
        %1116 = vst.msk [vmem:[#allocation2 + $0x30] sm:$0xff] %vm845, %v1108
        %1117 = vst.msk [vmem:[#allocation2 + $0x38] sm:$0xff] %vm845, %v1109
      $region36: #{basic_block_forward.4} parent=27 // pred_fallthru
        _
      %p1118 = scmp.eq.s32.totalorder %s22, 2
      // Predicated region
      $region37: #{basic_block_forward.4} parent=27 // pred_check
        %p1119 = pneg %p1118
      $region38: #{basic_block_forward.4} parent=27 // pred_check_branch
        %1121 = sbr.rel (%p1119) target = $region40
      $region39: #{basic_block_forward.4} parent=27 // pred_region
        %v1122 = vld [vmem:[#allocation2] sm:$0xff]
        %v1123 = vld [vmem:[#allocation2 + $0x8] sm:$0xff]
        %v1124 = vld [vmem:[#allocation2 + $0x10] sm:$0xff]
        %v1125 = vld [vmem:[#allocation2 + $0x18] sm:$0xff]
        %v1126 = vld [vmem:[#allocation2 + $0x20] sm:$0xff]
        %v1127 = vld [vmem:[#allocation2 + $0x28] sm:$0xff]
        %v1128 = vld [vmem:[#allocation2 + $0x30] sm:$0xff]
        %v1129 = vld [vmem:[#allocation2 + $0x38] sm:$0xff]
        %v1130 = vpack.c.bf16 %v1122, %v1122
        %v1131 = vpack.c.bf16 %v1123, %v1123
        %v1132 = vpack.c.bf16 %v1124, %v1124
        %v1133 = vpack.c.bf16 %v1125, %v1125
        %v1134 = vpack.c.bf16 %v1126, %v1126
        %v1135 = vpack.c.bf16 %v1127, %v1127
        %v1136 = vpack.c.bf16 %v1128, %v1128
        %v1137 = vpack.c.bf16 %v1129, %v1129
        %vm1138 = vcmask 27648
        %1139 = vst.msk [vmem:[%s233] sm:$0xf] %vm1138, %v1130
        %1140 = vst.msk [vmem:[%s233 + $0x4] sm:$0xf] %vm1138, %v1131
        %1141 = vst.msk [vmem:[%s233 + $0x8] sm:$0xf] %vm1138, %v1132
        %1142 = vst.msk [vmem:[%s233 + $0xc] sm:$0xf] %vm1138, %v1133
        %1143 = vst.msk [vmem:[%s233 + $0x10] sm:$0xf] %vm1138, %v1134
        %1144 = vst.msk [vmem:[%s233 + $0x14] sm:$0xf] %vm1138, %v1135
        %1145 = vst.msk [vmem:[%s233 + $0x18] sm:$0xf] %vm1138, %v1136
        %1146 = vst.msk [vmem:[%s233 + $0x1c] sm:$0xf] %vm1138, %v1137
        %v1147 = vsel %vm845, %v1122, 0.0
        %v1148 = vsel %vm845, %v1123, 0.0
        %v1149 = vadd.f32 %v1147, %v1148
        %v1150 = vsel %vm845, %v1124, 0.0
        %v1151 = vadd.f32 %v1149, %v1150
        %v1152 = vsel %vm845, %v1125, 0.0
        %v1153 = vadd.f32 %v1151, %v1152
        %v1154 = vsel %vm845, %v1126, 0.0
        %v1155 = vadd.f32 %v1153, %v1154
        %v1156 = vsel %vm845, %v1127, 0.0
        %v1157 = vadd.f32 %v1155, %v1156
        %v1158 = vsel %vm845, %v1128, 0.0
        %v1159 = vadd.f32 %v1157, %v1158
        %v1160 = vsel %vm845, %v1129, 0.0
        %v1161 = vadd.f32 %v1159, %v1160
        %v1162 = vrot.slane %v1161, 4
        %v1163 = vadd.f32 %v1161, %v1162
        %v1164 = vrot.slane %v1163, 2
        %v1165 = vadd.f32 %v1163, %v1164
        %v1166 = vrot.slane %v1165, 1
        %v1167 = vadd.f32 %v1165, %v1166
        %v1168 = vmul.f32 %v1122, %v1122
        %v1169 = vmul.f32 %v1123, %v1123
        %v1170 = vmul.f32 %v1124, %v1124
        %v1171 = vmul.f32 %v1125, %v1125
        %v1172 = vmul.f32 %v1126, %v1126
        %v1173 = vmul.f32 %v1127, %v1127
        %v1174 = vmul.f32 %v1128, %v1128
        %v1175 = vmul.f32 %v1129, %v1129
        %v1176 = vsel %vm845, %v1168, 0.0
        %v1177 = vsel %vm845, %v1169, 0.0
        %v1178 = vadd.f32 %v1176, %v1177
        %v1179 = vsel %vm845, %v1170, 0.0
        %v1180 = vadd.f32 %v1178, %v1179
        %v1181 = vsel %vm845, %v1171, 0.0
        %v1182 = vadd.f32 %v1180, %v1181
        %v1183 = vsel %vm845, %v1172, 0.0
        %v1184 = vadd.f32 %v1182, %v1183
        %v1185 = vsel %vm845, %v1173, 0.0
        %v1186 = vadd.f32 %v1184, %v1185
        %v1187 = vsel %vm845, %v1174, 0.0
        %v1188 = vadd.f32 %v1186, %v1187
        %v1189 = vsel %vm845, %v1175, 0.0
        %v1190 = vadd.f32 %v1188, %v1189
        %v1191 = vrot.slane %v1190, 4
        %v1192 = vadd.f32 %v1190, %v1191
        %v1193 = vrot.slane %v1192, 2
        %v1194 = vadd.f32 %v1192, %v1193
        %v1195 = vrot.slane %v1194, 1
        %v1196 = vadd.f32 %v1194, %v1195
        %vm1197 = vcmask 1040384
        %v1198 = vsel %vm1197, %v1167, %v1196
        %vm1199 = vcmask 25600
        %1200 = vst.msk [vmem:[%s241] sm:$0x3] %vm1199, %v1198
      $region40: #{basic_block_forward.4} parent=27 // pred_fallthru
        _
      %p1201 = scmp.lt.s32.totalorder %s20, 1
      %s1202 = scalar_select %p1201, %s20, 1
      %p1203 = scmp.lt.s32.totalorder %s21, 7
      %s1204 = scalar_select %p1203, %s21, 7
      %s1205 = smul.addr %s1204, 8
      %s1206 = smul.addr %s1202, 64
      %s1207 = sadd.s32 %s1205, %s1206
      %s1208 = smul.addr %s1207, 4
      %s1209 = scalar_lea.vmem %s2, %s1208
      %p1210 = scmp.lt.s32.totalorder %s20, 1
      %s1211 = scalar_select %p1210, %s20, 1
      %p1212 = scmp.lt.s32.totalorder %s21, 7
      %s1213 = scalar_select %p1212, %s21, 7
      %s1214 = smul.addr %s1211, 8
      %s1215 = sadd.s32 %s1213, %s1214
      %s1216 = smul.addr %s1215, 2
      %s1217 = scalar_lea.vmem %s3, %s1216
      // Predicated region
      $region41: #{basic_block_forward.4} parent=27 // pred_check
        %p1218 = pneg %p105
      $region42: #{basic_block_forward.4} parent=27 // pred_check_branch
        %1220 = sbr.rel (%p1218) target = $region44
      $region43: #{basic_block_forward.4} parent=27 // pred_region
        _
      $region44: #{basic_block_forward.4} parent=27 // pred_fallthru
        _
      // Predicated region
      $region45: #{basic_block_forward.4} parent=27 // pred_check
        %p1221 = pneg %p133
      $region46: #{basic_block_forward.4} parent=27 // pred_check_branch
        %1223 = sbr.rel (%p1221) target = $region48
      $region47: #{basic_block_forward.4} parent=27 // pred_region
        _
      $region48: #{basic_block_forward.4} parent=27 // pred_fallthru
        _
    $region28: #{basic_block_forward.4} parent=5 // pred_fallthru
      _
    %p1224 = scmp.le.s32.totalorder 2, %s10
    // Predicated region
    $region49: #{basic_block_forward.4} parent=5 // pred_check
      %p1225 = pneg %p1224
    $region50: #{basic_block_forward.4} parent=5 // pred_check_branch
      %1227 = sbr.rel (%p1225) target = $region52
    $region51: #{basic_block_forward.4} parent=5 // pred_region
      %s1228 = ssub.s32 %s10, 2
      // Predicated region
      $region53: #{basic_block_forward.4} parent=51 // pred_check
        %p1229 = pneg %p111
      $region54: #{basic_block_forward.4} parent=51 // pred_check_branch
        %1231 = sbr.rel (%p1229) target = $region56
      $region55: #{basic_block_forward.4} parent=51 // pred_region
        %p1232 = scmp.lt.s32.totalorder %s23, 1
        %s1233 = scalar_select %p1232, %s23, 1
        %p1234 = scmp.lt.s32.totalorder %s24, 7
        %s1235 = scalar_select %p1234, %s24, 7
        %s1236 = smul.addr %s1235, 8
        %s1237 = smul.addr %s1233, 64
        %s1238 = sadd.s32 %s1236, %s1237
        %s1239 = smul.addr %s1238, 4
        %s1240 = scalar_lea.vmem %s2, %s1239
      $region56: #{basic_block_forward.4} parent=51 // pred_fallthru
        _
      // Predicated region
      $region57: #{basic_block_forward.4} parent=51 // pred_check
        %p1241 = pneg %p139
      $region58: #{basic_block_forward.4} parent=51 // pred_check_branch
        %1243 = sbr.rel (%p1241) target = $region60
      $region59: #{basic_block_forward.4} parent=51 // pred_region
        %p1244 = scmp.lt.s32.totalorder %s23, 1
        %s1245 = scalar_select %p1244, %s23, 1
        %p1246 = scmp.lt.s32.totalorder %s24, 7
        %s1247 = scalar_select %p1246, %s24, 7
        %s1248 = smul.addr %s1245, 8
        %s1249 = sadd.s32 %s1247, %s1248
        %s1250 = smul.addr %s1249, 2
        %s1251 = scalar_lea.vmem %s3, %s1250
      $region60: #{basic_block_forward.4} parent=51 // pred_fallthru
        _
    $region52: #{basic_block_forward.4} parent=5 // pred_fallthru
      _
  $region6: #{basic_block_forward.4} parent=0 // loop_footer
    %s14 = sadd.s32 1, %s10
  $region7: #{basic_block_forward.4} parent=0 // loop_footer_branch
    %9 = sbr.rel target = $region3
  $region8: #{basic_block_forward.4} parent=0 // loop_exit
    _

// kernel: basic_block_forward.7
$region0: #{basic_block_forward.7}
  #allocation0 [shape = 'u32[]', space=smem, size = 0x4, offset = 0x4, fixed_abs, tag = 'smem constant byte address 0x4 - core index']
  #allocation1 [shape = 'u32[72,128]{1,0:T(1,128)}', space=vmem, size = 0x9000, scoped, tag = 'internal scratch']
  %s0 = inlined_call_operand.vmem [shape: bf16[16,256], index: 0, kind: input, shape index: {}]
  %s1 = inlined_call_operand.vmem [shape: f32[1,256], index: 1, kind: input, shape index: {}]
  %s2 = inlined_call_operand.vmem [shape: f32[1,256], index: 2, kind: input, shape index: {}]
  %s3 = inlined_call_operand.vmem [shape: bf16[16,256], index: 3, kind: input, shape index: {}]
  %s4 = inlined_call_operand.vmem [shape: f32[16,256], index: 4, kind: output, shape index: {}]
  %s5 = sld [smem:[#allocation0]]
  $region26: #{basic_block_forward.7} parent=0
    _
  %s7 = ssub.s32 1, %s5
  %s8 = scalar_select 0, %s7, %s5
  // Predicated region
  $region2: #{basic_block_forward.7} parent=0 // pred_check
    _
  $region3: #{basic_block_forward.7} parent=0 // pred_check_branch
    %10 = sbr.rel (0) target = $region5
  $region4: #{basic_block_forward.7} parent=0 // pred_region
    _
  $region5: #{basic_block_forward.7} parent=0 // pred_fallthru
    _
  // Predicated region
  $region6: #{basic_block_forward.7} parent=0 // pred_check
    _
  $region7: #{basic_block_forward.7} parent=0 // pred_check_branch
    %12 = sbr.rel (0) target = $region9
  $region8: #{basic_block_forward.7} parent=0 // pred_region
    _
  $region9: #{basic_block_forward.7} parent=0 // pred_fallthru
    _
  // Predicated region
  $region10: #{basic_block_forward.7} parent=0 // pred_check
    _
  $region11: #{basic_block_forward.7} parent=0 // pred_check_branch
    %14 = sbr.rel (0) target = $region13
  $region12: #{basic_block_forward.7} parent=0 // pred_region
    _
  $region13: #{basic_block_forward.7} parent=0 // pred_fallthru
    _
  // Predicated region
  $region14: #{basic_block_forward.7} parent=0 // pred_check
    _
  $region15: #{basic_block_forward.7} parent=0 // pred_check_branch
    %16 = sbr.rel (0) target = $region17
  $region16: #{basic_block_forward.7} parent=0 // pred_region
    _
  $region17: #{basic_block_forward.7} parent=0 // pred_fallthru
    _
  %v17 = vld [vmem:[%s0] sm:$0xff]
  %v18 = vld [vmem:[%s0 + $0x8] sm:$0xff]
  %v19 = vunpack.c.l.bf16 %v17
  %v20 = vunpack.c.h.bf16 %v17
  %v21 = vunpack.c.l.bf16 %v18
  %v22 = vunpack.c.h.bf16 %v18
  %v23 = vld [vmem:[%s3] sm:$0xff]
  %v24 = vld [vmem:[%s3 + $0x8] sm:$0xff]
  %v25 = vunpack.c.l.bf16 %v23
  %v26 = vunpack.c.h.bf16 %v23
  %v27 = vunpack.c.l.bf16 %v24
  %v28 = vunpack.c.h.bf16 %v24
  %v29 = vld [vmem:[%s1] sm:$0x3]
  %v31 = vperm.slane %v29, 0
  %v32 = vperm.slane %v29, 1
  %v35 = vmul.f32 %v19, %v31
  %v36 = vmul.f32 %v20, %v32
  %v37 = vmul.f32 %v21, %v31
  %v38 = vmul.f32 %v22, %v32
  %v39 = vld [vmem:[%s2] sm:$0x3]
  %v41 = vperm.slane %v39, 0
  %v42 = vperm.slane %v39, 1
  %v45 = vadd.f32 %v35, %v41
  %v46 = vadd.f32 %v36, %v42
  %v47 = vadd.f32 %v37, %v41
  %v48 = vadd.f32 %v38, %v42
  %v49 = vadd.f32 %v45, %v25
  %v50 = vadd.f32 %v46, %v26
  %v51 = vadd.f32 %v47, %v27
  %v52 = vadd.f32 %v48, %v28
  %v53 = vmax.f32 %v49, 0.0
  %v54 = vmax.f32 %v50, 0.0
  %v55 = vmax.f32 %v51, 0.0
  %v56 = vmax.f32 %v52, 0.0
  %57 = vst [vmem:[%s4] sm:$0xff] %v53
  %58 = vst [vmem:[%s4 + $0x8] sm:$0xff] %v54
  %59 = vst [vmem:[%s4 + $0x10] sm:$0xff] %v55
  %60 = vst [vmem:[%s4 + $0x18] sm:$0xff] %v56
  // Predicated region
  $region18: #{basic_block_forward.7} parent=0 // pred_check
    _
  $region19: #{basic_block_forward.7} parent=0 // pred_check_branch
    %62 = sbr.rel (0) target = $region21
  $region20: #{basic_block_forward.7} parent=0 // pred_region
    _
  $region21: #{basic_block_forward.7} parent=0 // pred_fallthru
    _
  // Predicated region
  $region22: #{basic_block_forward.7} parent=0 // pred_check
    _
  $region23: #{basic_block_forward.7} parent=0 // pred_check_branch
    %64 = sbr.rel (0) target = $region25
  $region24: #{basic_block_forward.7} parent=0 // pred_region
    _
  $region25: #{basic_block_forward.7} parent=0 // pred_fallthru
    _

</llo_original>
